<compile_context>
chip_gen: v6e
topology: v6e:2x2x1
jax: 0.10.0
libtpu: 0.0.40
codegen_flags: <defaults>
</compile_context>

<pallas_src>
import jax
import jax.numpy as jnp
from jax.experimental import pallas as pl
from jax.experimental.pallas import tpu as pltpu

# 784 -> 128 -> 64 -> 36 -> 18 -> 9 -> 18 -> 36 -> 64 -> 128 -> 784
LAYER_DIMS = [28 * 28, 128, 64, 36, 18, 9, 18, 36, 64, 128, 28 * 28]
N_LAYERS = len(LAYER_DIMS) - 1   # 10 Linear layers
MAX_BATCH_TILE = 256             # sweepable 128-512; 256 is a good default
D_PAD = 896                      # 7 * 128: lane-dense padding of the 784 dim


def _round_up(x, m):
    return (x + m - 1) // m * m


def ae_kernel(x_ref, *refs):
    """Full encoder+decoder MLP for one batch tile, entirely in VMEM."""
    out_ref = refs[-1]
    wb_refs = refs[:-1]  # alternating (w, b) refs, 10 layers

    h = x_ref[...].astype(jnp.float32)
    for li in range(N_LAYERS):
        w = wb_refs[2 * li][...]          # bf16 weights (MXU operands)
        b = wb_refs[2 * li + 1][...]      # f32 bias
        h = jnp.dot(h.astype(jnp.bfloat16), w,
                    preferred_element_type=jnp.float32) + b
        if li < N_LAYERS - 1:
            h = jnp.maximum(h, 0.0)        # ReLU between all layers...
        else:
            h = jax.nn.sigmoid(h)          # ...and Sigmoid on the last one.
    out_ref[...] = h.astype(out_ref.dtype)


@jax.jit
def ae_forward(x, params):
    """x: (B, 784) float32. params: list of (w, b) with w (in,out), b (1,out)."""
    B, D_in = x.shape
    assert D_in == LAYER_DIMS[0]

    # Batch tile: big enough to feed the MXU, but never larger than the
    # (8-rounded) batch itself so small batches run as a single block.
    tile = max(8, min(MAX_BATCH_TILE, _round_up(B, 8)))
    b_pad = _round_up(B, tile)
    grid = (b_pad // tile,)

    # Pad batch rows and the 784 feature dim to 896 (lane-dense).
    x_p = jnp.zeros((b_pad, D_PAD), jnp.float32).at[:B, :D_in].set(x)

    flat_params = []
    in_specs = [pl.BlockSpec((tile, D_PAD), lambda i: (i, 0))]
    for li, (w, b) in enumerate(params):
        w = w.astype(jnp.bfloat16)          # halve weight DMA / VMEM
        b = b.astype(jnp.float32)
        if li == 0:                          # zero-pad K of first matmul
            w = jnp.zeros((D_PAD, w.shape[1]), jnp.bfloat16).at[:D_in, :].set(w)
        if li == N_LAYERS - 1:               # zero-pad N of last matmul + bias
            w = jnp.zeros((w.shape[0], D_PAD), jnp.bfloat16).at[:, :LAYER_DIMS[-1]].set(w)
            b = jnp.zeros((1, D_PAD), jnp.float32).at[:, :LAYER_DIMS[-1]].set(b)
        flat_params.append(w)
        flat_params.append(b)
        # Weights/biases are small grid-invariant constants: full array, fixed block.
        in_specs.append(pl.BlockSpec(w.shape, lambda i: (0, 0)))
        in_specs.append(pl.BlockSpec(b.shape, lambda i: (0, 0)))

    out_spec = pl.BlockSpec((tile, D_PAD), lambda i: (i, 0))

    flops = 2 * b_pad * sum(LAYER_DIMS[l] * LAYER_DIMS[l + 1] for l in range(N_LAYERS))
    weight_bytes = sum(int(a.size) * a.dtype.itemsize for a in flat_params)
    bytes_accessed = int(x_p.size) * 4 + b_pad * D_PAD * 4 + weight_bytes

    out_p = pl.pallas_call(
        ae_kernel,
        out_shape=jax.ShapeDtypeStruct((b_pad, D_PAD), jnp.float32),
        grid_spec=pltpu.PrefetchScalarGridSpec(
            num_scalar_prefetch=0,
            grid=grid,
            in_specs=in_specs,
            out_specs=out_spec,
        ),
        compiler_params=pltpu.CompilerParams(
            dimension_semantics=("parallel",),
        ),
        cost_estimate=pl.CostEstimate(
            flops=flops,
            transcendentals=b_pad * LAYER_DIMS[-1],
            bytes_accessed=bytes_accessed,
        ),
    )(x_p, *flat_params)

    return out_p[:B, :LAYER_DIMS[-1]]


def init_params(key):
    """Deterministic init mimicking PyTorch Linear's U(-1/sqrt(fan_in), +1/sqrt(fan_in))."""
    params = []
    for li in range(N_LAYERS):
        fan_in, fan_out = LAYER_DIMS[li], LAYER_DIMS[li + 1]
        key, kw, kb = jax.random.split(key, 3)
        bound = 1.0 / jnp.sqrt(jnp.float32(fan_in))
        w = jax.random.uniform(kw, (fan_in, fan_out), jnp.float32, -bound, bound)
        b = jax.random.uniform(kb, (1, fan_out), jnp.float32, -bound, bound)
        params.append((w, b))
    return params


def ae_reference_f32(x, params):
    """Pure-JAX f32 reference (matches the PyTorch module's math)."""
    h = x
    for li, (w, b) in enumerate(params):
        h = h @ w + b
        h = jnp.maximum(h, 0.0) if li < N_LAYERS - 1 else jax.nn.sigmoid(h)
    return h


def ae_reference_bf16(x, params):
    """Reference with the same bf16-operand / f32-accumulate matmuls as the kernel."""
    h = x
    for li, (w, b) in enumerate(params):
        h = jnp.dot(h.astype(jnp.bfloat16), w.astype(jnp.bfloat16),
                    preferred_element_type=jnp.float32) + b
        h = jnp.maximum(h, 0.0) if li < N_LAYERS - 1 else jax.nn.sigmoid(h)
    return h


if __name__ == "__main__":
    key = jax.random.PRNGKey(0)
    key, kx1, kx2 = jax.random.split(key, 3)
    params = init_params(key)

    # Small batch: single block, grid of 1.
    B1 = 8
    x1 = jax.random.uniform(kx1, (B1, LAYER_DIMS[0]), jnp.float32)
    out1 = jax.block_until_ready(ae_forward(x1, params))
    assert out1.shape == (B1, LAYER_DIMS[-1])
    assert jnp.allclose(out1, ae_reference_bf16(x1, params), atol=1e-3, rtol=1e-3)
    assert jnp.allclose(out1, ae_reference_f32(x1, params), atol=2e-2, rtol=0)

    # Larger non-multiple batch: exercises 256-row tiling, batch padding and
    # the multi-step parallel grid.
    B2 = 272
    x2 = jax.random.uniform(kx2, (B2, LAYER_DIMS[0]), jnp.float32)
    out2 = jax.block_until_ready(ae_forward(x2, params))
    assert out2.shape == (B2, LAYER_DIMS[-1])
    assert jnp.allclose(out2, ae_reference_bf16(x2, params), atol=1e-3, rtol=1e-3)
    assert jnp.allclose(out2, ae_reference_f32(x2, params), atol=2e-2, rtol=0)

    print("KERNEL_OK")
</pallas_src>

<mosaic_0001>
module attributes {stable_mosaic.version = 11 : i64} {
  func.func @ae_kernel(%arg0: i32, %arg1: memref<8x896xf32, #tpu.memory_space<vmem>>, %arg2: memref<896x128xbf16, #tpu.memory_space<vmem>>, %arg3: memref<1x128xf32, #tpu.memory_space<vmem>>, %arg4: memref<128x64xbf16, #tpu.memory_space<vmem>>, %arg5: memref<1x64xf32, #tpu.memory_space<vmem>>, %arg6: memref<64x36xbf16, #tpu.memory_space<vmem>>, %arg7: memref<1x36xf32, #tpu.memory_space<vmem>>, %arg8: memref<36x18xbf16, #tpu.memory_space<vmem>>, %arg9: memref<1x18xf32, #tpu.memory_space<vmem>>, %arg10: memref<18x9xbf16, #tpu.memory_space<vmem>>, %arg11: memref<1x9xf32, #tpu.memory_space<vmem>>, %arg12: memref<9x18xbf16, #tpu.memory_space<vmem>>, %arg13: memref<1x18xf32, #tpu.memory_space<vmem>>, %arg14: memref<18x36xbf16, #tpu.memory_space<vmem>>, %arg15: memref<1x36xf32, #tpu.memory_space<vmem>>, %arg16: memref<36x64xbf16, #tpu.memory_space<vmem>>, %arg17: memref<1x64xf32, #tpu.memory_space<vmem>>, %arg18: memref<64x128xbf16, #tpu.memory_space<vmem>>, %arg19: memref<1x128xf32, #tpu.memory_space<vmem>>, %arg20: memref<128x896xbf16, #tpu.memory_space<vmem>>, %arg21: memref<1x896xf32, #tpu.memory_space<vmem>>, %arg22: memref<8x896xf32, #tpu.memory_space<vmem>>) attributes {dimension_semantics = [#tpu.dimension_semantics<parallel>], iteration_bounds = array<i64: 1>, scalar_prefetch = 0 : i64, scratch_operands = 0 : i64, tpu.core_type = #tpu.core_type<tc>, window_params = [{transform_indices = @transform_0, window_bounds = array<i64: 8, 896>}, {pipeline_mode = #tpu.pipeline_mode<synchronous>, transform_indices = @transform_1, window_bounds = array<i64: 896, 128>}, {pipeline_mode = #tpu.pipeline_mode<synchronous>, transform_indices = @transform_2, window_bounds = array<i64: 1, 128>}, {pipeline_mode = #tpu.pipeline_mode<synchronous>, transform_indices = @transform_3, window_bounds = array<i64: 128, 64>}, {pipeline_mode = #tpu.pipeline_mode<synchronous>, transform_indices = @transform_4, window_bounds = array<i64: 1, 64>}, {pipeline_mode = #tpu.pipeline_mode<synchronous>, transform_indices = @transform_5, window_bounds = array<i64: 64, 36>}, {pipeline_mode = #tpu.pipeline_mode<synchronous>, transform_indices = @transform_6, window_bounds = array<i64: 1, 36>}, {pipeline_mode = #tpu.pipeline_mode<synchronous>, transform_indices = @transform_7, window_bounds = array<i64: 36, 18>}, {pipeline_mode = #tpu.pipeline_mode<synchronous>, transform_indices = @transform_8, window_bounds = array<i64: 1, 18>}, {pipeline_mode = #tpu.pipeline_mode<synchronous>, transform_indices = @transform_9, window_bounds = array<i64: 18, 9>}, {pipeline_mode = #tpu.pipeline_mode<synchronous>, transform_indices = @transform_10, window_bounds = array<i64: 1, 9>}, {pipeline_mode = #tpu.pipeline_mode<synchronous>, transform_indices = @transform_11, window_bounds = array<i64: 9, 18>}, {pipeline_mode = #tpu.pipeline_mode<synchronous>, transform_indices = @transform_12, window_bounds = array<i64: 1, 18>}, {pipeline_mode = #tpu.pipeline_mode<synchronous>, transform_indices = @transform_13, window_bounds = array<i64: 18, 36>}, {pipeline_mode = #tpu.pipeline_mode<synchronous>, transform_indices = @transform_14, window_bounds = array<i64: 1, 36>}, {pipeline_mode = #tpu.pipeline_mode<synchronous>, transform_indices = @transform_15, window_bounds = array<i64: 36, 64>}, {pipeline_mode = #tpu.pipeline_mode<synchronous>, transform_indices = @transform_16, window_bounds = array<i64: 1, 64>}, {pipeline_mode = #tpu.pipeline_mode<synchronous>, transform_indices = @transform_17, window_bounds = array<i64: 64, 128>}, {pipeline_mode = #tpu.pipeline_mode<synchronous>, transform_indices = @transform_18, window_bounds = array<i64: 1, 128>}, {pipeline_mode = #tpu.pipeline_mode<synchronous>, transform_indices = @transform_19, window_bounds = array<i64: 128, 896>}, {pipeline_mode = #tpu.pipeline_mode<synchronous>, transform_indices = @transform_20, window_bounds = array<i64: 1, 896>}, {transform_indices = @transform_21, window_bounds = array<i64: 8, 896>}]} {
    %c0 = arith.constant 0 : index
    %c0_0 = arith.constant 0 : index
    %0 = vector.load %arg1[%c0, %c0_0] : memref<8x896xf32, #tpu.memory_space<vmem>>, vector<8x896xf32>
    %c0_1 = arith.constant 0 : index
    %c0_2 = arith.constant 0 : index
    %1 = vector.load %arg2[%c0_1, %c0_2] : memref<896x128xbf16, #tpu.memory_space<vmem>>, vector<896x128xbf16>
    %c0_3 = arith.constant 0 : index
    %c0_4 = arith.constant 0 : index
    %2 = vector.load %arg3[%c0_3, %c0_4] : memref<1x128xf32, #tpu.memory_space<vmem>>, vector<1x128xf32>
    %3 = arith.truncf %0 : vector<8x896xf32> to vector<8x896xbf16>
    %cst = arith.constant dense<0.000000e+00> : vector<8x128xf32>
    %4 = tpu.matmul %3, %1, %cst {dimension_numbers = #tpu.dot_dimension_numbers<[1], [0], [0], [1], [0, 0, 1, 1], [], []>} : vector<8x896xbf16>, vector<896x128xbf16>, vector<8x128xf32> -> vector<8x128xf32>
    %5 = vector.broadcast %2 : vector<1x128xf32> to vector<8x128xf32>
    %6 = arith.addf %4, %5 : vector<8x128xf32>
    %cst_5 = arith.constant 0.000000e+00 : f32
    %7 = vector.broadcast %cst_5 : f32 to vector<8x128xf32>
    %8 = arith.maximumf %6, %7 : vector<8x128xf32>
    %c0_6 = arith.constant 0 : index
    %c0_7 = arith.constant 0 : index
    %9 = vector.load %arg4[%c0_6, %c0_7] : memref<128x64xbf16, #tpu.memory_space<vmem>>, vector<128x64xbf16>
    %c0_8 = arith.constant 0 : index
    %c0_9 = arith.constant 0 : index
    %10 = vector.load %arg5[%c0_8, %c0_9] : memref<1x64xf32, #tpu.memory_space<vmem>>, vector<1x64xf32>
    %11 = arith.truncf %8 : vector<8x128xf32> to vector<8x128xbf16>
    %cst_10 = arith.constant dense<0.000000e+00> : vector<8x64xf32>
    %12 = tpu.matmul %11, %9, %cst_10 {dimension_numbers = #tpu.dot_dimension_numbers<[1], [0], [0], [1], [0, 0, 1, 1], [], []>} : vector<8x128xbf16>, vector<128x64xbf16>, vector<8x64xf32> -> vector<8x64xf32>
    %13 = vector.broadcast %10 : vector<1x64xf32> to vector<8x64xf32>
    %14 = arith.addf %12, %13 : vector<8x64xf32>
    %cst_11 = arith.constant 0.000000e+00 : f32
    %15 = vector.broadcast %cst_11 : f32 to vector<8x64xf32>
    %16 = arith.maximumf %14, %15 : vector<8x64xf32>
    %c0_12 = arith.constant 0 : index
    %c0_13 = arith.constant 0 : index
    %17 = vector.load %arg6[%c0_12, %c0_13] : memref<64x36xbf16, #tpu.memory_space<vmem>>, vector<64x36xbf16>
    %c0_14 = arith.constant 0 : index
    %c0_15 = arith.constant 0 : index
    %18 = vector.load %arg7[%c0_14, %c0_15] : memref<1x36xf32, #tpu.memory_space<vmem>>, vector<1x36xf32>
    %19 = arith.truncf %16 : vector<8x64xf32> to vector<8x64xbf16>
    %cst_16 = arith.constant dense<0.000000e+00> : vector<8x36xf32>
    %20 = tpu.matmul %19, %17, %cst_16 {dimension_numbers = #tpu.dot_dimension_numbers<[1], [0], [0], [1], [0, 0, 1, 1], [], []>} : vector<8x64xbf16>, vector<64x36xbf16>, vector<8x36xf32> -> vector<8x36xf32>
    %21 = vector.broadcast %18 : vector<1x36xf32> to vector<8x36xf32>
    %22 = arith.addf %20, %21 : vector<8x36xf32>
    %cst_17 = arith.constant 0.000000e+00 : f32
    %23 = vector.broadcast %cst_17 : f32 to vector<8x36xf32>
    %24 = arith.maximumf %22, %23 : vector<8x36xf32>
    %c0_18 = arith.constant 0 : index
    %c0_19 = arith.constant 0 : index
    %25 = vector.load %arg8[%c0_18, %c0_19] : memref<36x18xbf16, #tpu.memory_space<vmem>>, vector<36x18xbf16>
    %c0_20 = arith.constant 0 : index
    %c0_21 = arith.constant 0 : index
    %26 = vector.load %arg9[%c0_20, %c0_21] : memref<1x18xf32, #tpu.memory_space<vmem>>, vector<1x18xf32>
    %27 = arith.truncf %24 : vector<8x36xf32> to vector<8x36xbf16>
    %cst_22 = arith.constant dense<0.000000e+00> : vector<8x18xf32>
    %28 = tpu.matmul %27, %25, %cst_22 {dimension_numbers = #tpu.dot_dimension_numbers<[1], [0], [0], [1], [0, 0, 1, 1], [], []>} : vector<8x36xbf16>, vector<36x18xbf16>, vector<8x18xf32> -> vector<8x18xf32>
    %29 = vector.broadcast %26 : vector<1x18xf32> to vector<8x18xf32>
    %30 = arith.addf %28, %29 : vector<8x18xf32>
    %cst_23 = arith.constant 0.000000e+00 : f32
    %31 = vector.broadcast %cst_23 : f32 to vector<8x18xf32>
    %32 = arith.maximumf %30, %31 : vector<8x18xf32>
    %c0_24 = arith.constant 0 : index
    %c0_25 = arith.constant 0 : index
    %33 = vector.load %arg10[%c0_24, %c0_25] : memref<18x9xbf16, #tpu.memory_space<vmem>>, vector<18x9xbf16>
    %c0_26 = arith.constant 0 : index
    %c0_27 = arith.constant 0 : index
    %34 = vector.load %arg11[%c0_26, %c0_27] : memref<1x9xf32, #tpu.memory_space<vmem>>, vector<1x9xf32>
    %35 = arith.truncf %32 : vector<8x18xf32> to vector<8x18xbf16>
    %cst_28 = arith.constant dense<0.000000e+00> : vector<8x9xf32>
    %36 = tpu.matmul %35, %33, %cst_28 {dimension_numbers = #tpu.dot_dimension_numbers<[1], [0], [0], [1], [0, 0, 1, 1], [], []>} : vector<8x18xbf16>, vector<18x9xbf16>, vector<8x9xf32> -> vector<8x9xf32>
    %37 = vector.broadcast %34 : vector<1x9xf32> to vector<8x9xf32>
    %38 = arith.addf %36, %37 : vector<8x9xf32>
    %cst_29 = arith.constant 0.000000e+00 : f32
    %39 = vector.broadcast %cst_29 : f32 to vector<8x9xf32>
    %40 = arith.maximumf %38, %39 : vector<8x9xf32>
    %c0_30 = arith.constant 0 : index
    %c0_31 = arith.constant 0 : index
    %41 = vector.load %arg12[%c0_30, %c0_31] : memref<9x18xbf16, #tpu.memory_space<vmem>>, vector<9x18xbf16>
    %c0_32 = arith.constant 0 : index
    %c0_33 = arith.constant 0 : index
    %42 = vector.load %arg13[%c0_32, %c0_33] : memref<1x18xf32, #tpu.memory_space<vmem>>, vector<1x18xf32>
    %43 = arith.truncf %40 : vector<8x9xf32> to vector<8x9xbf16>
    %cst_34 = arith.constant dense<0.000000e+00> : vector<8x18xf32>
    %44 = tpu.matmul %43, %41, %cst_34 {dimension_numbers = #tpu.dot_dimension_numbers<[1], [0], [0], [1], [0, 0, 1, 1], [], []>} : vector<8x9xbf16>, vector<9x18xbf16>, vector<8x18xf32> -> vector<8x18xf32>
    %45 = vector.broadcast %42 : vector<1x18xf32> to vector<8x18xf32>
    %46 = arith.addf %44, %45 : vector<8x18xf32>
    %cst_35 = arith.constant 0.000000e+00 : f32
    %47 = vector.broadcast %cst_35 : f32 to vector<8x18xf32>
    %48 = arith.maximumf %46, %47 : vector<8x18xf32>
    %c0_36 = arith.constant 0 : index
    %c0_37 = arith.constant 0 : index
    %49 = vector.load %arg14[%c0_36, %c0_37] : memref<18x36xbf16, #tpu.memory_space<vmem>>, vector<18x36xbf16>
    %c0_38 = arith.constant 0 : index
    %c0_39 = arith.constant 0 : index
    %50 = vector.load %arg15[%c0_38, %c0_39] : memref<1x36xf32, #tpu.memory_space<vmem>>, vector<1x36xf32>
    %51 = arith.truncf %48 : vector<8x18xf32> to vector<8x18xbf16>
    %cst_40 = arith.constant dense<0.000000e+00> : vector<8x36xf32>
    %52 = tpu.matmul %51, %49, %cst_40 {dimension_numbers = #tpu.dot_dimension_numbers<[1], [0], [0], [1], [0, 0, 1, 1], [], []>} : vector<8x18xbf16>, vector<18x36xbf16>, vector<8x36xf32> -> vector<8x36xf32>
    %53 = vector.broadcast %50 : vector<1x36xf32> to vector<8x36xf32>
    %54 = arith.addf %52, %53 : vector<8x36xf32>
    %cst_41 = arith.constant 0.000000e+00 : f32
    %55 = vector.broadcast %cst_41 : f32 to vector<8x36xf32>
    %56 = arith.maximumf %54, %55 : vector<8x36xf32>
    %c0_42 = arith.constant 0 : index
    %c0_43 = arith.constant 0 : index
    %57 = vector.load %arg16[%c0_42, %c0_43] : memref<36x64xbf16, #tpu.memory_space<vmem>>, vector<36x64xbf16>
    %c0_44 = arith.constant 0 : index
    %c0_45 = arith.constant 0 : index
    %58 = vector.load %arg17[%c0_44, %c0_45] : memref<1x64xf32, #tpu.memory_space<vmem>>, vector<1x64xf32>
    %59 = arith.truncf %56 : vector<8x36xf32> to vector<8x36xbf16>
    %cst_46 = arith.constant dense<0.000000e+00> : vector<8x64xf32>
    %60 = tpu.matmul %59, %57, %cst_46 {dimension_numbers = #tpu.dot_dimension_numbers<[1], [0], [0], [1], [0, 0, 1, 1], [], []>} : vector<8x36xbf16>, vector<36x64xbf16>, vector<8x64xf32> -> vector<8x64xf32>
    %61 = vector.broadcast %58 : vector<1x64xf32> to vector<8x64xf32>
    %62 = arith.addf %60, %61 : vector<8x64xf32>
    %cst_47 = arith.constant 0.000000e+00 : f32
    %63 = vector.broadcast %cst_47 : f32 to vector<8x64xf32>
    %64 = arith.maximumf %62, %63 : vector<8x64xf32>
    %c0_48 = arith.constant 0 : index
    %c0_49 = arith.constant 0 : index
    %65 = vector.load %arg18[%c0_48, %c0_49] : memref<64x128xbf16, #tpu.memory_space<vmem>>, vector<64x128xbf16>
    %c0_50 = arith.constant 0 : index
    %c0_51 = arith.constant 0 : index
    %66 = vector.load %arg19[%c0_50, %c0_51] : memref<1x128xf32, #tpu.memory_space<vmem>>, vector<1x128xf32>
    %67 = arith.truncf %64 : vector<8x64xf32> to vector<8x64xbf16>
    %cst_52 = arith.constant dense<0.000000e+00> : vector<8x128xf32>
    %68 = tpu.matmul %67, %65, %cst_52 {dimension_numbers = #tpu.dot_dimension_numbers<[1], [0], [0], [1], [0, 0, 1, 1], [], []>} : vector<8x64xbf16>, vector<64x128xbf16>, vector<8x128xf32> -> vector<8x128xf32>
    %69 = vector.broadcast %66 : vector<1x128xf32> to vector<8x128xf32>
    %70 = arith.addf %68, %69 : vector<8x128xf32>
    %cst_53 = arith.constant 0.000000e+00 : f32
    %71 = vector.broadcast %cst_53 : f32 to vector<8x128xf32>
    %72 = arith.maximumf %70, %71 : vector<8x128xf32>
    %c0_54 = arith.constant 0 : index
    %c0_55 = arith.constant 0 : index
    %73 = vector.load %arg20[%c0_54, %c0_55] : memref<128x896xbf16, #tpu.memory_space<vmem>>, vector<128x896xbf16>
    %c0_56 = arith.constant 0 : index
    %c0_57 = arith.constant 0 : index
    %74 = vector.load %arg21[%c0_56, %c0_57] : memref<1x896xf32, #tpu.memory_space<vmem>>, vector<1x896xf32>
    %75 = arith.truncf %72 : vector<8x128xf32> to vector<8x128xbf16>
    %cst_58 = arith.constant dense<0.000000e+00> : vector<8x896xf32>
    %76 = tpu.matmul %75, %73, %cst_58 {dimension_numbers = #tpu.dot_dimension_numbers<[1], [0], [0], [1], [0, 0, 1, 1], [], []>} : vector<8x128xbf16>, vector<128x896xbf16>, vector<8x896xf32> -> vector<8x896xf32>
    %77 = vector.broadcast %74 : vector<1x896xf32> to vector<8x896xf32>
    %78 = arith.addf %76, %77 : vector<8x896xf32>
    %79 = arith.negf %78 : vector<8x896xf32>
    %80 = math.exp %79 : vector<8x896xf32>
    %cst_59 = arith.constant 1.000000e+00 : f32
    %81 = vector.broadcast %cst_59 : f32 to vector<8x896xf32>
    %82 = arith.addf %81, %80 : vector<8x896xf32>
    %83 = arith.divf %81, %82 : vector<8x896xf32>
    %c0_60 = arith.constant 0 : index
    %c0_61 = arith.constant 0 : index
    %84 = vector.load %arg22[%c0_60, %c0_61] : memref<8x896xf32, #tpu.memory_space<vmem>>, vector<8x896xf32>
    tpu.vector_store %arg22[%c0_60, %c0_61], %83 {strides = array<i32>} : memref<8x896xf32, #tpu.memory_space<vmem>>, vector<8x896xf32>,
    return
  }
  func.func @transform_0(%arg0: i32) -> (i32, i32) {
    %c0_i32 = arith.constant 0 : i32
    %c0_i32_0 = arith.constant 0 : i32
    return %arg0, %c0_i32 : i32, i32
  }
  func.func @transform_1(%arg0: i32) -> (i32, i32) {
    %c0_i32 = arith.constant 0 : i32
    %c0_i32_0 = arith.constant 0 : i32
    %c0_i32_1 = arith.constant 0 : i32
    return %c0_i32, %c0_i32_0 : i32, i32
  }
  func.func @transform_2(%arg0: i32) -> (i32, i32) {
    %c0_i32 = arith.constant 0 : i32
    %c0_i32_0 = arith.constant 0 : i32
    %c0_i32_1 = arith.constant 0 : i32
    return %c0_i32, %c0_i32_0 : i32, i32
  }
  func.func @transform_3(%arg0: i32) -> (i32, i32) {
    %c0_i32 = arith.constant 0 : i32
    %c0_i32_0 = arith.constant 0 : i32
    %c0_i32_1 = arith.constant 0 : i32
    return %c0_i32, %c0_i32_0 : i32, i32
  }
  func.func @transform_4(%arg0: i32) -> (i32, i32) {
    %c0_i32 = arith.constant 0 : i32
    %c0_i32_0 = arith.constant 0 : i32
    %c0_i32_1 = arith.constant 0 : i32
    return %c0_i32, %c0_i32_0 : i32, i32
  }
  func.func @transform_5(%arg0: i32) -> (i32, i32) {
    %c0_i32 = arith.constant 0 : i32
    %c0_i32_0 = arith.constant 0 : i32
    %c0_i32_1 = arith.constant 0 : i32
    return %c0_i32, %c0_i32_0 : i32, i32
  }
  func.func @transform_6(%arg0: i32) -> (i32, i32) {
    %c0_i32 = arith.constant 0 : i32
    %c0_i32_0 = arith.constant 0 : i32
    %c0_i32_1 = arith.constant 0 : i32
    return %c0_i32, %c0_i32_0 : i32, i32
  }
  func.func @transform_7(%arg0: i32) -> (i32, i32) {
    %c0_i32 = arith.constant 0 : i32
    %c0_i32_0 = arith.constant 0 : i32
    %c0_i32_1 = arith.constant 0 : i32
    return %c0_i32, %c0_i32_0 : i32, i32
  }
  func.func @transform_8(%arg0: i32) -> (i32, i32) {
    %c0_i32 = arith.constant 0 : i32
    %c0_i32_0 = arith.constant 0 : i32
    %c0_i32_1 = arith.constant 0 : i32
    return %c0_i32, %c0_i32_0 : i32, i32
  }
  func.func @transform_9(%arg0: i32) -> (i32, i32) {
    %c0_i32 = arith.constant 0 : i32
    %c0_i32_0 = arith.constant 0 : i32
    %c0_i32_1 = arith.constant 0 : i32
    return %c0_i32, %c0_i32_0 : i32, i32
  }
  func.func @transform_10(%arg0: i32) -> (i32, i32) {
    %c0_i32 = arith.constant 0 : i32
    %c0_i32_0 = arith.constant 0 : i32
    %c0_i32_1 = arith.constant 0 : i32
    return %c0_i32, %c0_i32_0 : i32, i32
  }
  func.func @transform_11(%arg0: i32) -> (i32, i32) {
    %c0_i32 = arith.constant 0 : i32
    %c0_i32_0 = arith.constant 0 : i32
    %c0_i32_1 = arith.constant 0 : i32
    return %c0_i32, %c0_i32_0 : i32, i32
  }
  func.func @transform_12(%arg0: i32) -> (i32, i32) {
    %c0_i32 = arith.constant 0 : i32
    %c0_i32_0 = arith.constant 0 : i32
    %c0_i32_1 = arith.constant 0 : i32
    return %c0_i32, %c0_i32_0 : i32, i32
  }
  func.func @transform_13(%arg0: i32) -> (i32, i32) {
    %c0_i32 = arith.constant 0 : i32
    %c0_i32_0 = arith.constant 0 : i32
    %c0_i32_1 = arith.constant 0 : i32
    return %c0_i32, %c0_i32_0 : i32, i32
  }
  func.func @transform_14(%arg0: i32) -> (i32, i32) {
    %c0_i32 = arith.constant 0 : i32
    %c0_i32_0 = arith.constant 0 : i32
    %c0_i32_1 = arith.constant 0 : i32
    return %c0_i32, %c0_i32_0 : i32, i32
  }
  func.func @transform_15(%arg0: i32) -> (i32, i32) {
    %c0_i32 = arith.constant 0 : i32
    %c0_i32_0 = arith.constant 0 : i32
    %c0_i32_1 = arith.constant 0 : i32
    return %c0_i32, %c0_i32_0 : i32, i32
  }
  func.func @transform_16(%arg0: i32) -> (i32, i32) {
    %c0_i32 = arith.constant 0 : i32
    %c0_i32_0 = arith.constant 0 : i32
    %c0_i32_1 = arith.constant 0 : i32
    return %c0_i32, %c0_i32_0 : i32, i32
  }
  func.func @transform_17(%arg0: i32) -> (i32, i32) {
    %c0_i32 = arith.constant 0 : i32
    %c0_i32_0 = arith.constant 0 : i32
    %c0_i32_1 = arith.constant 0 : i32
    return %c0_i32, %c0_i32_0 : i32, i32
  }
  func.func @transform_18(%arg0: i32) -> (i32, i32) {
    %c0_i32 = arith.constant 0 : i32
    %c0_i32_0 = arith.constant 0 : i32
    %c0_i32_1 = arith.constant 0 : i32
    return %c0_i32, %c0_i32_0 : i32, i32
  }
  func.func @transform_19(%arg0: i32) -> (i32, i32) {
    %c0_i32 = arith.constant 0 : i32
    %c0_i32_0 = arith.constant 0 : i32
    %c0_i32_1 = arith.constant 0 : i32
    return %c0_i32, %c0_i32_0 : i32, i32
  }
  func.func @transform_20(%arg0: i32) -> (i32, i32) {
    %c0_i32 = arith.constant 0 : i32
    %c0_i32_0 = arith.constant 0 : i32
    %c0_i32_1 = arith.constant 0 : i32
    return %c0_i32, %c0_i32_0 : i32, i32
  }
  func.func @transform_21(%arg0: i32) -> (i32, i32) {
    %c0_i32 = arith.constant 0 : i32
    %c0_i32_0 = arith.constant 0 : i32
    return %arg0, %c0_i32 : i32, i32
  }
}

</mosaic_0001>

<llo_original>
// kernel: ae_forward.1
$region0: #{ae_forward.1}
  #allocation0 [shape = 'u32[]', space=smem, size = 0x4, offset = 0x4, fixed_abs, tag = 'smem constant byte address 0x4 - core index']
  #allocation1 [shape = 'u32[144,128]{1,0:T(1,128)}', space=vmem, size = 0x12000, scoped, tag = 'internal scratch']
  %s0 = inlined_call_operand.vmem [shape: f32[8,896], index: 0, kind: input, shape index: {}]
  %s1 = inlined_call_operand.vmem [shape: bf16[896,128], index: 1, kind: input, shape index: {}]
  %s2 = inlined_call_operand.vmem [shape: f32[1,128], index: 2, kind: input, shape index: {}]
  %s3 = inlined_call_operand.vmem [shape: bf16[128,64], index: 3, kind: input, shape index: {}]
  %s4 = inlined_call_operand.vmem [shape: f32[1,64], index: 4, kind: input, shape index: {}]
  %s5 = inlined_call_operand.vmem [shape: bf16[64,36], index: 5, kind: input, shape index: {}]
  %s6 = inlined_call_operand.vmem [shape: f32[1,36], index: 6, kind: input, shape index: {}]
  %s7 = inlined_call_operand.vmem [shape: bf16[36,18], index: 7, kind: input, shape index: {}]
  %s8 = inlined_call_operand.vmem [shape: f32[1,18], index: 8, kind: input, shape index: {}]
  %s9 = inlined_call_operand.vmem [shape: bf16[18,9], index: 9, kind: input, shape index: {}]
  %s10 = inlined_call_operand.vmem [shape: f32[1,9], index: 10, kind: input, shape index: {}]
  %s11 = inlined_call_operand.vmem [shape: bf16[9,18], index: 11, kind: input, shape index: {}]
  %s12 = inlined_call_operand.vmem [shape: f32[1,18], index: 12, kind: input, shape index: {}]
  %s13 = inlined_call_operand.vmem [shape: bf16[18,36], index: 13, kind: input, shape index: {}]
  %s14 = inlined_call_operand.vmem [shape: f32[1,36], index: 14, kind: input, shape index: {}]
  %s15 = inlined_call_operand.vmem [shape: bf16[36,64], index: 15, kind: input, shape index: {}]
  %s16 = inlined_call_operand.vmem [shape: f32[1,64], index: 16, kind: input, shape index: {}]
  %s17 = inlined_call_operand.vmem [shape: bf16[64,128], index: 17, kind: input, shape index: {}]
  %s18 = inlined_call_operand.vmem [shape: f32[1,128], index: 18, kind: input, shape index: {}]
  %s19 = inlined_call_operand.vmem [shape: bf16[128,896], index: 19, kind: input, shape index: {}]
  %s20 = inlined_call_operand.vmem [shape: f32[1,896], index: 20, kind: input, shape index: {}]
  %s21 = inlined_call_operand.hbm [shape: f32[8,896], index: 21, kind: output, shape index: {}]
  %s22 = sld [smem:[#allocation0]]
  $region94: #{ae_forward.1} parent=0
    _
  %s24 = ssub.s32 1, %s22
  %s25 = scalar_select 0, %s24, %s22
  $region1: #{ae_forward.1} parent=0
    #allocation2 [shape = 'u8[28672]{0}', space=vmem, size = 0x7000, scoped, tag = 'output window, operand 0, single buffered']
    #allocation3 [shape = 's32[1]{0}', space=sflag, size = 0x4, scoped, tag = 'scoped memory for ae_forward.1']
    %26 = vsyncpa [#allocation3], 0
    // Predicated region
    $region2: #{ae_forward.1} parent=1 // pred_check
      _
    $region3: #{ae_forward.1} parent=1 // pred_check_branch
      %28 = sbr.rel (0) target = $region5
    $region4: #{ae_forward.1} parent=1 // pred_region
      _
    $region5: #{ae_forward.1} parent=1 // pred_fallthru
      _
    // Predicated region
    $region6: #{ae_forward.1} parent=1 // pred_check
      _
    $region7: #{ae_forward.1} parent=1 // pred_check_branch
      %30 = sbr.rel (0) target = $region9
    $region8: #{ae_forward.1} parent=1 // pred_region
      _
    $region9: #{ae_forward.1} parent=1 // pred_fallthru
      _
    // Predicated region
    $region10: #{ae_forward.1} parent=1 // pred_check
      _
    $region11: #{ae_forward.1} parent=1 // pred_check_branch
      %32 = sbr.rel (0) target = $region13
    $region12: #{ae_forward.1} parent=1 // pred_region
      _
    $region13: #{ae_forward.1} parent=1 // pred_fallthru
      _
    // Predicated region
    $region14: #{ae_forward.1} parent=1 // pred_check
      _
    $region15: #{ae_forward.1} parent=1 // pred_check_branch
      %34 = sbr.rel (0) target = $region17
    $region16: #{ae_forward.1} parent=1 // pred_region
      _
    $region17: #{ae_forward.1} parent=1 // pred_fallthru
      _
    // Predicated region
    $region18: #{ae_forward.1} parent=1 // pred_check
      _
    $region19: #{ae_forward.1} parent=1 // pred_check_branch
      %36 = sbr.rel (0) target = $region21
    $region20: #{ae_forward.1} parent=1 // pred_region
      _
    $region21: #{ae_forward.1} parent=1 // pred_fallthru
      _
    // Predicated region
    $region22: #{ae_forward.1} parent=1 // pred_check
      _
    $region23: #{ae_forward.1} parent=1 // pred_check_branch
      %38 = sbr.rel (0) target = $region25
    $region24: #{ae_forward.1} parent=1 // pred_region
      _
    $region25: #{ae_forward.1} parent=1 // pred_fallthru
      _
    // Predicated region
    $region26: #{ae_forward.1} parent=1 // pred_check
      _
    $region27: #{ae_forward.1} parent=1 // pred_check_branch
      %40 = sbr.rel (0) target = $region29
    $region28: #{ae_forward.1} parent=1 // pred_region
      _
    $region29: #{ae_forward.1} parent=1 // pred_fallthru
      _
    // Predicated region
    $region30: #{ae_forward.1} parent=1 // pred_check
      _
    $region31: #{ae_forward.1} parent=1 // pred_check_branch
      %42 = sbr.rel (0) target = $region33
    $region32: #{ae_forward.1} parent=1 // pred_region
      _
    $region33: #{ae_forward.1} parent=1 // pred_fallthru
      _
    // Predicated region
    $region34: #{ae_forward.1} parent=1 // pred_check
      _
    $region35: #{ae_forward.1} parent=1 // pred_check_branch
      %44 = sbr.rel (0) target = $region37
    $region36: #{ae_forward.1} parent=1 // pred_region
      _
    $region37: #{ae_forward.1} parent=1 // pred_fallthru
      _
    // Predicated region
    $region38: #{ae_forward.1} parent=1 // pred_check
      _
    $region39: #{ae_forward.1} parent=1 // pred_check_branch
      %46 = sbr.rel (0) target = $region41
    $region40: #{ae_forward.1} parent=1 // pred_region
      _
    $region41: #{ae_forward.1} parent=1 // pred_fallthru
      _
    // Predicated region
    $region42: #{ae_forward.1} parent=1 // pred_check
      _
    $region43: #{ae_forward.1} parent=1 // pred_check_branch
      %48 = sbr.rel (0) target = $region45
    $region44: #{ae_forward.1} parent=1 // pred_region
      _
    $region45: #{ae_forward.1} parent=1 // pred_fallthru
      _
    // Predicated region
    $region46: #{ae_forward.1} parent=1 // pred_check
      _
    $region47: #{ae_forward.1} parent=1 // pred_check_branch
      %50 = sbr.rel (0) target = $region49
    $region48: #{ae_forward.1} parent=1 // pred_region
      _
    $region49: #{ae_forward.1} parent=1 // pred_fallthru
      _
    // Predicated region
    $region50: #{ae_forward.1} parent=1 // pred_check
      _
    $region51: #{ae_forward.1} parent=1 // pred_check_branch
      %52 = sbr.rel (0) target = $region53
    $region52: #{ae_forward.1} parent=1 // pred_region
      _
    $region53: #{ae_forward.1} parent=1 // pred_fallthru
      _
    // Predicated region
    $region54: #{ae_forward.1} parent=1 // pred_check
      _
    $region55: #{ae_forward.1} parent=1 // pred_check_branch
      %54 = sbr.rel (0) target = $region57
    $region56: #{ae_forward.1} parent=1 // pred_region
      _
    $region57: #{ae_forward.1} parent=1 // pred_fallthru
      _
    // Predicated region
    $region58: #{ae_forward.1} parent=1 // pred_check
      _
    $region59: #{ae_forward.1} parent=1 // pred_check_branch
      %56 = sbr.rel (0) target = $region61
    $region60: #{ae_forward.1} parent=1 // pred_region
      _
    $region61: #{ae_forward.1} parent=1 // pred_fallthru
      _
    // Predicated region
    $region62: #{ae_forward.1} parent=1 // pred_check
      _
    $region63: #{ae_forward.1} parent=1 // pred_check_branch
      %58 = sbr.rel (0) target = $region65
    $region64: #{ae_forward.1} parent=1 // pred_region
      _
    $region65: #{ae_forward.1} parent=1 // pred_fallthru
      _
    // Predicated region
    $region66: #{ae_forward.1} parent=1 // pred_check
      _
    $region67: #{ae_forward.1} parent=1 // pred_check_branch
      %60 = sbr.rel (0) target = $region69
    $region68: #{ae_forward.1} parent=1 // pred_region
      _
    $region69: #{ae_forward.1} parent=1 // pred_fallthru
      _
    // Predicated region
    $region70: #{ae_forward.1} parent=1 // pred_check
      _
    $region71: #{ae_forward.1} parent=1 // pred_check_branch
      %62 = sbr.rel (0) target = $region73
    $region72: #{ae_forward.1} parent=1 // pred_region
      _
    $region73: #{ae_forward.1} parent=1 // pred_fallthru
      _
    // Predicated region
    $region74: #{ae_forward.1} parent=1 // pred_check
      _
    $region75: #{ae_forward.1} parent=1 // pred_check_branch
      %64 = sbr.rel (0) target = $region77
    $region76: #{ae_forward.1} parent=1 // pred_region
      _
    $region77: #{ae_forward.1} parent=1 // pred_fallthru
      _
    // Predicated region
    $region78: #{ae_forward.1} parent=1 // pred_check
      _
    $region79: #{ae_forward.1} parent=1 // pred_check_branch
      %66 = sbr.rel (0) target = $region81
    $region80: #{ae_forward.1} parent=1 // pred_region
      _
    $region81: #{ae_forward.1} parent=1 // pred_fallthru
      _
    // Predicated region
    $region82: #{ae_forward.1} parent=1 // pred_check
      _
    $region83: #{ae_forward.1} parent=1 // pred_check_branch
      %68 = sbr.rel (0) target = $region85
    $region84: #{ae_forward.1} parent=1 // pred_region
      _
    $region85: #{ae_forward.1} parent=1 // pred_fallthru
      _
    %v70 = vld [vmem:[%s0] sm:$0xff]
    %v71 = vld [vmem:[%s0 + $0x8] sm:$0xff]
    %v72 = vld [vmem:[%s0 + $0x10] sm:$0xff]
    %v73 = vld [vmem:[%s0 + $0x18] sm:$0xff]
    %v74 = vld [vmem:[%s0 + $0x20] sm:$0xff]
    %v75 = vld [vmem:[%s0 + $0x28] sm:$0xff]
    %v76 = vld [vmem:[%s0 + $0x30] sm:$0xff]
    %v77 = vld [vmem:[%s1] sm:$0xf]
    %v78 = vld [vmem:[%s1 + $0x4] sm:$0xf]
    %v79 = vld [vmem:[%s1 + $0x8] sm:$0xf]
    %v80 = vld [vmem:[%s1 + $0xc] sm:$0xf]
    %v81 = vld [vmem:[%s1 + $0x10] sm:$0xf]
    %v82 = vld [vmem:[%s1 + $0x14] sm:$0xf]
    %v83 = vld [vmem:[%s1 + $0x18] sm:$0xf]
    %v84 = vld [vmem:[%s1 + $0x1c] sm:$0xf]
    %v85 = vld [vmem:[%s1 + $0x20] sm:$0xf]
    %v86 = vld [vmem:[%s1 + $0x24] sm:$0xf]
    %v87 = vld [vmem:[%s1 + $0x28] sm:$0xf]
    %v88 = vld [vmem:[%s1 + $0x2c] sm:$0xf]
    %v89 = vld [vmem:[%s1 + $0x30] sm:$0xf]
    %v90 = vld [vmem:[%s1 + $0x34] sm:$0xf]
    %v91 = vld [vmem:[%s1 + $0x38] sm:$0xf]
    %v92 = vld [vmem:[%s1 + $0x3c] sm:$0xf]
    %v93 = vld [vmem:[%s1 + $0x40] sm:$0xf]
    %v94 = vld [vmem:[%s1 + $0x44] sm:$0xf]
    %v95 = vld [vmem:[%s1 + $0x48] sm:$0xf]
    %v96 = vld [vmem:[%s1 + $0x4c] sm:$0xf]
    %v97 = vld [vmem:[%s1 + $0x50] sm:$0xf]
    %v98 = vld [vmem:[%s1 + $0x54] sm:$0xf]
    %v99 = vld [vmem:[%s1 + $0x58] sm:$0xf]
    %v100 = vld [vmem:[%s1 + $0x5c] sm:$0xf]
    %v101 = vld [vmem:[%s1 + $0x60] sm:$0xf]
    %v102 = vld [vmem:[%s1 + $0x64] sm:$0xf]
    %v103 = vld [vmem:[%s1 + $0x68] sm:$0xf]
    %v104 = vld [vmem:[%s1 + $0x6c] sm:$0xf]
    %v105 = vld [vmem:[%s1 + $0x70] sm:$0xf]
    %v106 = vld [vmem:[%s1 + $0x74] sm:$0xf]
    %v107 = vld [vmem:[%s1 + $0x78] sm:$0xf]
    %v108 = vld [vmem:[%s1 + $0x7c] sm:$0xf]
    %v109 = vld [vmem:[%s1 + $0x80] sm:$0xf]
    %v110 = vld [vmem:[%s1 + $0x84] sm:$0xf]
    %v111 = vld [vmem:[%s1 + $0x88] sm:$0xf]
    %v112 = vld [vmem:[%s1 + $0x8c] sm:$0xf]
    %v113 = vld [vmem:[%s1 + $0x90] sm:$0xf]
    %v114 = vld [vmem:[%s1 + $0x94] sm:$0xf]
    %v115 = vld [vmem:[%s1 + $0x98] sm:$0xf]
    %v116 = vld [vmem:[%s1 + $0x9c] sm:$0xf]
    %v117 = vld [vmem:[%s1 + $0xa0] sm:$0xf]
    %v118 = vld [vmem:[%s1 + $0xa4] sm:$0xf]
    %v119 = vld [vmem:[%s1 + $0xa8] sm:$0xf]
    %v120 = vld [vmem:[%s1 + $0xac] sm:$0xf]
    %v121 = vld [vmem:[%s1 + $0xb0] sm:$0xf]
    %v122 = vld [vmem:[%s1 + $0xb4] sm:$0xf]
    %v123 = vld [vmem:[%s1 + $0xb8] sm:$0xf]
    %v124 = vld [vmem:[%s1 + $0xbc] sm:$0xf]
    %v125 = vld [vmem:[%s1 + $0xc0] sm:$0xf]
    %v126 = vld [vmem:[%s1 + $0xc4] sm:$0xf]
    %v127 = vld [vmem:[%s1 + $0xc8] sm:$0xf]
    %v128 = vld [vmem:[%s1 + $0xcc] sm:$0xf]
    %v129 = vld [vmem:[%s1 + $0xd0] sm:$0xf]
    %v130 = vld [vmem:[%s1 + $0xd4] sm:$0xf]
    %v131 = vld [vmem:[%s1 + $0xd8] sm:$0xf]
    %v132 = vld [vmem:[%s1 + $0xdc] sm:$0xf]
    %v133 = vld [vmem:[%s1 + $0xe0] sm:$0xf]
    %v134 = vld [vmem:[%s1 + $0xe4] sm:$0xf]
    %v135 = vld [vmem:[%s1 + $0xe8] sm:$0xf]
    %v136 = vld [vmem:[%s1 + $0xec] sm:$0xf]
    %v137 = vld [vmem:[%s1 + $0xf0] sm:$0xf]
    %v138 = vld [vmem:[%s1 + $0xf4] sm:$0xf]
    %v139 = vld [vmem:[%s1 + $0xf8] sm:$0xf]
    %v140 = vld [vmem:[%s1 + $0xfc] sm:$0xf]
    %v141 = vld [vmem:[%s1 + $0x100] sm:$0xf]
    %v142 = vld [vmem:[%s1 + $0x104] sm:$0xf]
    %v143 = vld [vmem:[%s1 + $0x108] sm:$0xf]
    %v144 = vld [vmem:[%s1 + $0x10c] sm:$0xf]
    %v145 = vld [vmem:[%s1 + $0x110] sm:$0xf]
    %v146 = vld [vmem:[%s1 + $0x114] sm:$0xf]
    %v147 = vld [vmem:[%s1 + $0x118] sm:$0xf]
    %v148 = vld [vmem:[%s1 + $0x11c] sm:$0xf]
    %v149 = vld [vmem:[%s1 + $0x120] sm:$0xf]
    %v150 = vld [vmem:[%s1 + $0x124] sm:$0xf]
    %v151 = vld [vmem:[%s1 + $0x128] sm:$0xf]
    %v152 = vld [vmem:[%s1 + $0x12c] sm:$0xf]
    %v153 = vld [vmem:[%s1 + $0x130] sm:$0xf]
    %v154 = vld [vmem:[%s1 + $0x134] sm:$0xf]
    %v155 = vld [vmem:[%s1 + $0x138] sm:$0xf]
    %v156 = vld [vmem:[%s1 + $0x13c] sm:$0xf]
    %v157 = vld [vmem:[%s1 + $0x140] sm:$0xf]
    %v158 = vld [vmem:[%s1 + $0x144] sm:$0xf]
    %v159 = vld [vmem:[%s1 + $0x148] sm:$0xf]
    %v160 = vld [vmem:[%s1 + $0x14c] sm:$0xf]
    %v161 = vld [vmem:[%s1 + $0x150] sm:$0xf]
    %v162 = vld [vmem:[%s1 + $0x154] sm:$0xf]
    %v163 = vld [vmem:[%s1 + $0x158] sm:$0xf]
    %v164 = vld [vmem:[%s1 + $0x15c] sm:$0xf]
    %v165 = vld [vmem:[%s1 + $0x160] sm:$0xf]
    %v166 = vld [vmem:[%s1 + $0x164] sm:$0xf]
    %v167 = vld [vmem:[%s1 + $0x168] sm:$0xf]
    %v168 = vld [vmem:[%s1 + $0x16c] sm:$0xf]
    %v169 = vld [vmem:[%s1 + $0x170] sm:$0xf]
    %v170 = vld [vmem:[%s1 + $0x174] sm:$0xf]
    %v171 = vld [vmem:[%s1 + $0x178] sm:$0xf]
    %v172 = vld [vmem:[%s1 + $0x17c] sm:$0xf]
    %v173 = vld [vmem:[%s1 + $0x180] sm:$0xf]
    %v174 = vld [vmem:[%s1 + $0x184] sm:$0xf]
    %v175 = vld [vmem:[%s1 + $0x188] sm:$0xf]
    %v176 = vld [vmem:[%s1 + $0x18c] sm:$0xf]
    %v177 = vld [vmem:[%s1 + $0x190] sm:$0xf]
    %v178 = vld [vmem:[%s1 + $0x194] sm:$0xf]
    %v179 = vld [vmem:[%s1 + $0x198] sm:$0xf]
    %v180 = vld [vmem:[%s1 + $0x19c] sm:$0xf]
    %v181 = vld [vmem:[%s1 + $0x1a0] sm:$0xf]
    %v182 = vld [vmem:[%s1 + $0x1a4] sm:$0xf]
    %v183 = vld [vmem:[%s1 + $0x1a8] sm:$0xf]
    %v184 = vld [vmem:[%s1 + $0x1ac] sm:$0xf]
    %v185 = vld [vmem:[%s1 + $0x1b0] sm:$0xf]
    %v186 = vld [vmem:[%s1 + $0x1b4] sm:$0xf]
    %v187 = vld [vmem:[%s1 + $0x1b8] sm:$0xf]
    %v188 = vld [vmem:[%s1 + $0x1bc] sm:$0xf]
    %v189 = vld [vmem:[%s2] sm:$0x1]
    %v190 = vpack.c.bf16 %v70, %v70
    %v191 = vpack.c.bf16 %v71, %v71
    %v192 = vpack.c.bf16 %v72, %v72
    %v193 = vpack.c.bf16 %v73, %v73
    %v194 = vpack.c.bf16 %v74, %v74
    %v195 = vpack.c.bf16 %v75, %v75
    %v196 = vpack.c.bf16 %v76, %v76
    %v198 = vlaneseq
    %v199 = vshrl.u32 %v198, 7
    %v200 = vsub.s32 0, %v199
    %v201 = vrot.slane %v189, %v200
    %v315 = vunpack.c.l.b16 %v77
    %v316 = vunpack.c.l.b16 %v78
    %v317 = vunpack.c.l.b16 %v79
    %v318 = vunpack.c.l.b16 %v80
    %v319 = vunpack.c.l.b16 %v81
    %v320 = vunpack.c.l.b16 %v82
    %v321 = vunpack.c.l.b16 %v83
    %v322 = vunpack.c.l.b16 %v84
    %v323 = vunpack.c.l.b16 %v85
    %v324 = vunpack.c.l.b16 %v86
    %v325 = vunpack.c.l.b16 %v87
    %v326 = vunpack.c.l.b16 %v88
    %v327 = vunpack.c.l.b16 %v89
    %v328 = vunpack.c.l.b16 %v90
    %v329 = vunpack.c.l.b16 %v91
    %v330 = vunpack.c.l.b16 %v92
    %v331 = vunpack.c.l.b16 %v93
    %v332 = vunpack.c.l.b16 %v94
    %v333 = vunpack.c.l.b16 %v95
    %v334 = vunpack.c.l.b16 %v96
    %v335 = vunpack.c.l.b16 %v97
    %v336 = vunpack.c.l.b16 %v98
    %v337 = vunpack.c.l.b16 %v99
    %v338 = vunpack.c.l.b16 %v100
    %v339 = vunpack.c.l.b16 %v101
    %v340 = vunpack.c.l.b16 %v102
    %v341 = vunpack.c.l.b16 %v103
    %v342 = vunpack.c.l.b16 %v104
    %v343 = vunpack.c.l.b16 %v105
    %v344 = vunpack.c.l.b16 %v106
    %v345 = vunpack.c.l.b16 %v107
    %v346 = vunpack.c.l.b16 %v108
    %v347 = vunpack.c.l.b16 %v109
    %v348 = vunpack.c.l.b16 %v110
    %v349 = vunpack.c.l.b16 %v111
    %v350 = vunpack.c.l.b16 %v112
    %v351 = vunpack.c.l.b16 %v113
    %v352 = vunpack.c.l.b16 %v114
    %v353 = vunpack.c.l.b16 %v115
    %v354 = vunpack.c.l.b16 %v116
    %v355 = vunpack.c.l.b16 %v117
    %v356 = vunpack.c.l.b16 %v118
    %v357 = vunpack.c.l.b16 %v119
    %v358 = vunpack.c.l.b16 %v120
    %v359 = vunpack.c.l.b16 %v121
    %v360 = vunpack.c.l.b16 %v122
    %v361 = vunpack.c.l.b16 %v123
    %v362 = vunpack.c.l.b16 %v124
    %v363 = vunpack.c.l.b16 %v125
    %v364 = vunpack.c.l.b16 %v126
    %v365 = vunpack.c.l.b16 %v127
    %v366 = vunpack.c.l.b16 %v128
    %v367 = vunpack.c.l.b16 %v129
    %v368 = vunpack.c.l.b16 %v130
    %v369 = vunpack.c.l.b16 %v131
    %v370 = vunpack.c.l.b16 %v132
    %v371 = vunpack.c.l.b16 %v133
    %v372 = vunpack.c.l.b16 %v134
    %v373 = vunpack.c.l.b16 %v135
    %v374 = vunpack.c.l.b16 %v136
    %v375 = vunpack.c.l.b16 %v137
    %v376 = vunpack.c.l.b16 %v138
    %v377 = vunpack.c.l.b16 %v139
    %v378 = vunpack.c.l.b16 %v140
    %v379 = vunpack.c.l.b16 %v141
    %v380 = vunpack.c.l.b16 %v142
    %v381 = vunpack.c.l.b16 %v143
    %v382 = vunpack.c.l.b16 %v144
    %v383 = vunpack.c.l.b16 %v145
    %v384 = vunpack.c.l.b16 %v146
    %v385 = vunpack.c.l.b16 %v147
    %v386 = vunpack.c.l.b16 %v148
    %v387 = vunpack.c.l.b16 %v149
    %v388 = vunpack.c.l.b16 %v150
    %v389 = vunpack.c.l.b16 %v151
    %v390 = vunpack.c.l.b16 %v152
    %v391 = vunpack.c.l.b16 %v153
    %v392 = vunpack.c.l.b16 %v154
    %v393 = vunpack.c.l.b16 %v155
    %v394 = vunpack.c.l.b16 %v156
    %v395 = vunpack.c.l.b16 %v157
    %v396 = vunpack.c.l.b16 %v158
    %v397 = vunpack.c.l.b16 %v159
    %v398 = vunpack.c.l.b16 %v160
    %v399 = vunpack.c.l.b16 %v161
    %v400 = vunpack.c.l.b16 %v162
    %v401 = vunpack.c.l.b16 %v163
    %v402 = vunpack.c.l.b16 %v164
    %v403 = vunpack.c.l.b16 %v165
    %v404 = vunpack.c.l.b16 %v166
    %v405 = vunpack.c.l.b16 %v167
    %v406 = vunpack.c.l.b16 %v168
    %v407 = vunpack.c.l.b16 %v169
    %v408 = vunpack.c.l.b16 %v170
    %v409 = vunpack.c.l.b16 %v171
    %v410 = vunpack.c.l.b16 %v172
    %v411 = vunpack.c.l.b16 %v173
    %v412 = vunpack.c.l.b16 %v174
    %v413 = vunpack.c.l.b16 %v175
    %v414 = vunpack.c.l.b16 %v176
    %v415 = vunpack.c.l.b16 %v177
    %v416 = vunpack.c.l.b16 %v178
    %v417 = vunpack.c.l.b16 %v179
    %v418 = vunpack.c.l.b16 %v180
    %v419 = vunpack.c.l.b16 %v181
    %v420 = vunpack.c.l.b16 %v182
    %v421 = vunpack.c.l.b16 %v183
    %v422 = vunpack.c.l.b16 %v184
    %v423 = vunpack.c.l.b16 %v185
    %v424 = vunpack.c.l.b16 %v186
    %v425 = vunpack.c.l.b16 %v187
    %v426 = vunpack.c.l.b16 %v188
    %v427 = vpack.c.b16 %v316, %v315
    %v428 = vpack.c.b16 %v318, %v317
    %v429 = vpack.c.b16 %v320, %v319
    %v430 = vpack.c.b16 %v322, %v321
    %v431 = vpack.c.b16 %v324, %v323
    %v432 = vpack.c.b16 %v326, %v325
    %v433 = vpack.c.b16 %v328, %v327
    %v434 = vpack.c.b16 %v330, %v329
    %v435 = vpack.c.b16 %v332, %v331
    %v436 = vpack.c.b16 %v334, %v333
    %v437 = vpack.c.b16 %v336, %v335
    %v438 = vpack.c.b16 %v338, %v337
    %v439 = vpack.c.b16 %v340, %v339
    %v440 = vpack.c.b16 %v342, %v341
    %v441 = vpack.c.b16 %v344, %v343
    %v442 = vpack.c.b16 %v346, %v345
    %v443 = vpack.c.b16 %v348, %v347
    %v444 = vpack.c.b16 %v350, %v349
    %v445 = vpack.c.b16 %v352, %v351
    %v446 = vpack.c.b16 %v354, %v353
    %v447 = vpack.c.b16 %v356, %v355
    %v448 = vpack.c.b16 %v358, %v357
    %v449 = vpack.c.b16 %v360, %v359
    %v450 = vpack.c.b16 %v362, %v361
    %v451 = vpack.c.b16 %v364, %v363
    %v452 = vpack.c.b16 %v366, %v365
    %v453 = vpack.c.b16 %v368, %v367
    %v454 = vpack.c.b16 %v370, %v369
    %v455 = vpack.c.b16 %v372, %v371
    %v456 = vpack.c.b16 %v374, %v373
    %v457 = vpack.c.b16 %v376, %v375
    %v458 = vpack.c.b16 %v378, %v377
    %v459 = vpack.c.b16 %v380, %v379
    %v460 = vpack.c.b16 %v382, %v381
    %v461 = vpack.c.b16 %v384, %v383
    %v462 = vpack.c.b16 %v386, %v385
    %v463 = vpack.c.b16 %v388, %v387
    %v464 = vpack.c.b16 %v390, %v389
    %v465 = vpack.c.b16 %v392, %v391
    %v466 = vpack.c.b16 %v394, %v393
    %v467 = vpack.c.b16 %v396, %v395
    %v468 = vpack.c.b16 %v398, %v397
    %v469 = vpack.c.b16 %v400, %v399
    %v470 = vpack.c.b16 %v402, %v401
    %v471 = vpack.c.b16 %v404, %v403
    %v472 = vpack.c.b16 %v406, %v405
    %v473 = vpack.c.b16 %v408, %v407
    %v474 = vpack.c.b16 %v410, %v409
    %v475 = vpack.c.b16 %v412, %v411
    %v476 = vpack.c.b16 %v414, %v413
    %v477 = vpack.c.b16 %v416, %v415
    %v478 = vpack.c.b16 %v418, %v417
    %v479 = vpack.c.b16 %v420, %v419
    %v480 = vpack.c.b16 %v422, %v421
    %v481 = vpack.c.b16 %v424, %v423
    %v482 = vpack.c.b16 %v426, %v425
    %539 = vmatprep.subr.bf16.mxu0 0
    %540 = vmatpush1.bf16.msra.mxu0 %v434
    %541 = vmatprep.subr.bf16.mxu0 0
    %542 = vmatpush1.bf16.msra.mxu0 %v433
    %543 = vmatprep.subr.bf16.mxu0 0
    %544 = vmatpush1.bf16.msra.mxu0 %v432
    %545 = vmatprep.subr.bf16.mxu0 0
    %546 = vmatpush1.bf16.msra.mxu0 %v431
    %547 = vmatprep.subr.bf16.mxu0 0
    %548 = vmatpush1.bf16.msra.mxu0 %v430
    %549 = vmatprep.subr.bf16.mxu0 0
    %550 = vmatpush1.bf16.msra.mxu0 %v429
    %551 = vmatprep.subr.bf16.mxu0 0
    %552 = vmatpush1.bf16.msra.mxu0 %v428
    %553 = vmatprep.subr.bf16.mxu0 0
    %554 = vmatpush1.bf16.msra.mxu0 %v427
    %555 = vmatprep.subr.bf16.mxu0 0
    %556 = vmatpush2.bf16.msra.mxu0 %v442
    %557 = vmatprep.subr.bf16.mxu0 0
    %558 = vmatpush2.bf16.msra.mxu0 %v441
    %559 = vmatprep.subr.bf16.mxu0 0
    %560 = vmatpush2.bf16.msra.mxu0 %v440
    %561 = vmatprep.subr.bf16.mxu0 0
    %562 = vmatpush2.bf16.msra.mxu0 %v439
    %563 = vmatprep.subr.bf16.mxu0 0
    %564 = vmatpush2.bf16.msra.mxu0 %v438
    %565 = vmatprep.subr.bf16.mxu0 0
    %566 = vmatpush2.bf16.msra.mxu0 %v437
    %567 = vmatprep.subr.bf16.mxu0 0
    %568 = vmatpush2.bf16.msra.mxu0 %v436
    %569 = vmatprep.subr.bf16.mxu0 0
    %570 = vmatpush2.bf16.msra.mxu0 %v435
    %571 = vmatprep.mubr.bf16.mxu0 %v191
    %572 = vmatmul.mubr.bf16.gmra.mxu0 %v190
    %v573 = vpop.f32.mrf.mxu0
    %v574 = vadd.f32 %v201, %v573
    %v575 = vpop.f32.mrf.mxu0
    %v576 = vpop.f32.mrf.mxu0
    %v577 = vpop.f32.mrf.mxu0
    %578 = vdwg.mxu0
    %579 = vmatprep.subr.bf16.mxu0 0
    %580 = vmatpush1.bf16.msra.mxu0 %v450
    %581 = vmatprep.subr.bf16.mxu0 0
    %582 = vmatpush1.bf16.msra.mxu0 %v449
    %583 = vmatprep.subr.bf16.mxu0 0
    %584 = vmatpush1.bf16.msra.mxu0 %v448
    %585 = vmatprep.subr.bf16.mxu0 0
    %586 = vmatpush1.bf16.msra.mxu0 %v447
    %587 = vmatprep.subr.bf16.mxu0 0
    %588 = vmatpush1.bf16.msra.mxu0 %v446
    %589 = vmatprep.subr.bf16.mxu0 0
    %590 = vmatpush1.bf16.msra.mxu0 %v445
    %591 = vmatprep.subr.bf16.mxu0 0
    %592 = vmatpush1.bf16.msra.mxu0 %v444
    %593 = vmatprep.subr.bf16.mxu0 0
    %594 = vmatpush1.bf16.msra.mxu0 %v443
    %595 = vmatprep.subr.bf16.mxu0 0
    %596 = vmatpush2.bf16.msra.mxu0 %v458
    %597 = vmatprep.subr.bf16.mxu0 0
    %598 = vmatpush2.bf16.msra.mxu0 %v457
    %599 = vmatprep.subr.bf16.mxu0 0
    %600 = vmatpush2.bf16.msra.mxu0 %v456
    %601 = vmatprep.subr.bf16.mxu0 0
    %602 = vmatpush2.bf16.msra.mxu0 %v455
    %603 = vmatprep.subr.bf16.mxu0 0
    %604 = vmatpush2.bf16.msra.mxu0 %v454
    %605 = vmatprep.subr.bf16.mxu0 0
    %606 = vmatpush2.bf16.msra.mxu0 %v453
    %607 = vmatprep.subr.bf16.mxu0 0
    %608 = vmatpush2.bf16.msra.mxu0 %v452
    %609 = vmatprep.subr.bf16.mxu0 0
    %610 = vmatpush2.bf16.msra.mxu0 %v451
    %611 = vmatprep.mubr.bf16.mxu0 %v193
    %612 = vmatmul.mubr.bf16.gmra.mxu0 %v192
    %v613 = vpop.f32.mrf.mxu0
    %v614 = vadd.f32 %v574, %v613
    %v615 = vpop.f32.mrf.mxu0
    %v616 = vpop.f32.mrf.mxu0
    %v617 = vpop.f32.mrf.mxu0
    %618 = vdwg.mxu0
    %619 = vmatprep.subr.bf16.mxu0 0
    %620 = vmatpush1.bf16.msra.mxu0 %v466
    %621 = vmatprep.subr.bf16.mxu0 0
    %622 = vmatpush1.bf16.msra.mxu0 %v465
    %623 = vmatprep.subr.bf16.mxu0 0
    %624 = vmatpush1.bf16.msra.mxu0 %v464
    %625 = vmatprep.subr.bf16.mxu0 0
    %626 = vmatpush1.bf16.msra.mxu0 %v463
    %627 = vmatprep.subr.bf16.mxu0 0
    %628 = vmatpush1.bf16.msra.mxu0 %v462
    %629 = vmatprep.subr.bf16.mxu0 0
    %630 = vmatpush1.bf16.msra.mxu0 %v461
    %631 = vmatprep.subr.bf16.mxu0 0
    %632 = vmatpush1.bf16.msra.mxu0 %v460
    %633 = vmatprep.subr.bf16.mxu0 0
    %634 = vmatpush1.bf16.msra.mxu0 %v459
    %635 = vmatprep.subr.bf16.mxu0 0
    %636 = vmatpush2.bf16.msra.mxu0 %v474
    %637 = vmatprep.subr.bf16.mxu0 0
    %638 = vmatpush2.bf16.msra.mxu0 %v473
    %639 = vmatprep.subr.bf16.mxu0 0
    %640 = vmatpush2.bf16.msra.mxu0 %v472
    %641 = vmatprep.subr.bf16.mxu0 0
    %642 = vmatpush2.bf16.msra.mxu0 %v471
    %643 = vmatprep.subr.bf16.mxu0 0
    %644 = vmatpush2.bf16.msra.mxu0 %v470
    %645 = vmatprep.subr.bf16.mxu0 0
    %646 = vmatpush2.bf16.msra.mxu0 %v469
    %647 = vmatprep.subr.bf16.mxu0 0
    %648 = vmatpush2.bf16.msra.mxu0 %v468
    %649 = vmatprep.subr.bf16.mxu0 0
    %650 = vmatpush2.bf16.msra.mxu0 %v467
    %651 = vmatprep.mubr.bf16.mxu0 %v195
    %652 = vmatmul.mubr.bf16.gmra.mxu0 %v194
    %v653 = vpop.f32.mrf.mxu0
    %v654 = vadd.f32 %v614, %v653
    %v655 = vpop.f32.mrf.mxu0
    %v656 = vpop.f32.mrf.mxu0
    %v657 = vpop.f32.mrf.mxu0
    %658 = vdwg.mxu0
    %659 = vmatprep.subr.bf16.mxu0 0
    %660 = vmatpush1.bf16.msra.mxu0 %v482
    %661 = vmatprep.subr.bf16.mxu0 0
    %662 = vmatpush1.bf16.msra.mxu0 %v481
    %663 = vmatprep.subr.bf16.mxu0 0
    %664 = vmatpush1.bf16.msra.mxu0 %v480
    %665 = vmatprep.subr.bf16.mxu0 0
    %666 = vmatpush1.bf16.msra.mxu0 %v479
    %667 = vmatprep.subr.bf16.mxu0 0
    %668 = vmatpush1.bf16.msra.mxu0 %v478
    %669 = vmatprep.subr.bf16.mxu0 0
    %670 = vmatpush1.bf16.msra.mxu0 %v477
    %671 = vmatprep.subr.bf16.mxu0 0
    %672 = vmatpush1.bf16.msra.mxu0 %v476
    %673 = vmatprep.subr.bf16.mxu0 0
    %674 = vmatpush1.bf16.msra.mxu0 %v475
    %675 = vmatprep.subr.bf16.mxu0 0
    %676 = vmatpush2.bf16.msra.mxu0 0
    %677 = vmatprep.subr.bf16.mxu0 0
    %678 = vmatpush2.bf16.msra.mxu0 0
    %679 = vmatprep.subr.bf16.mxu0 0
    %680 = vmatpush2.bf16.msra.mxu0 0
    %681 = vmatprep.subr.bf16.mxu0 0
    %682 = vmatpush2.bf16.msra.mxu0 0
    %683 = vmatprep.subr.bf16.mxu0 0
    %684 = vmatpush2.bf16.msra.mxu0 0
    %685 = vmatprep.subr.bf16.mxu0 0
    %686 = vmatpush2.bf16.msra.mxu0 0
    %687 = vmatprep.subr.bf16.mxu0 0
    %688 = vmatpush2.bf16.msra.mxu0 0
    %689 = vmatprep.subr.bf16.mxu0 0
    %690 = vmatpush2.bf16.msra.mxu0 0
    %691 = vmatprep.mubr.bf16.mxu0 0
    %692 = vmatmul.mubr.bf16.gmra.mxu0 %v196
    %v693 = vpop.f32.mrf.mxu0
    %v694 = vadd.f32 %v654, %v693
    %v695 = vpop.f32.mrf.mxu0
    %v696 = vpop.f32.mrf.mxu0
    %v697 = vpop.f32.mrf.mxu0
    %698 = vdwg.mxu0
    %v699 = vmax.f32 %v694, 0.0
    %v700 = vld [vmem:[%s3] sm:$0xf]
    %v701 = vld [vmem:[%s3 + $0x4] sm:$0xf]
    %v702 = vld [vmem:[%s3 + $0x8] sm:$0xf]
    %v703 = vld [vmem:[%s3 + $0xc] sm:$0xf]
    %v704 = vld [vmem:[%s3 + $0x10] sm:$0xf]
    %v705 = vld [vmem:[%s3 + $0x14] sm:$0xf]
    %v706 = vld [vmem:[%s3 + $0x18] sm:$0xf]
    %v707 = vld [vmem:[%s3 + $0x1c] sm:$0xf]
    %v708 = vld [vmem:[%s3 + $0x20] sm:$0xf]
    %v709 = vld [vmem:[%s3 + $0x24] sm:$0xf]
    %v710 = vld [vmem:[%s3 + $0x28] sm:$0xf]
    %v711 = vld [vmem:[%s3 + $0x2c] sm:$0xf]
    %v712 = vld [vmem:[%s3 + $0x30] sm:$0xf]
    %v713 = vld [vmem:[%s3 + $0x34] sm:$0xf]
    %v714 = vld [vmem:[%s3 + $0x38] sm:$0xf]
    %v715 = vld [vmem:[%s3 + $0x3c] sm:$0xf]
    %v716 = vld [vmem:[%s4] sm:$0x1]
    %v717 = vpack.c.bf16 %v699, %v699
    %v719 = vlaneseq
    %v720 = vshrl.u32 %v719, 7
    %v721 = vsub.s32 0, %v720
    %v722 = vrot.slane %v716, %v721
    %v740 = vunpack.c.l.b16 %v700
    %v741 = vunpack.c.l.b16 %v701
    %v742 = vunpack.c.l.b16 %v702
    %v743 = vunpack.c.l.b16 %v703
    %v744 = vunpack.c.l.b16 %v704
    %v745 = vunpack.c.l.b16 %v705
    %v746 = vunpack.c.l.b16 %v706
    %v747 = vunpack.c.l.b16 %v707
    %v748 = vunpack.c.l.b16 %v708
    %v749 = vunpack.c.l.b16 %v709
    %v750 = vunpack.c.l.b16 %v710
    %v751 = vunpack.c.l.b16 %v711
    %v752 = vunpack.c.l.b16 %v712
    %v753 = vunpack.c.l.b16 %v713
    %v754 = vunpack.c.l.b16 %v714
    %v755 = vunpack.c.l.b16 %v715
    %v756 = vpack.c.b16 %v741, %v740
    %v757 = vpack.c.b16 %v743, %v742
    %v758 = vpack.c.b16 %v745, %v744
    %v759 = vpack.c.b16 %v747, %v746
    %v760 = vpack.c.b16 %v749, %v748
    %v761 = vpack.c.b16 %v751, %v750
    %v762 = vpack.c.b16 %v753, %v752
    %v763 = vpack.c.b16 %v755, %v754
    %772 = vmatprep.subr.bf16.mxu0 0
    %773 = vmatpush1.bf16.msra.mxu0 %v763
    %774 = vmatprep.subr.bf16.mxu0 0
    %775 = vmatpush1.bf16.msra.mxu0 %v762
    %776 = vmatprep.subr.bf16.mxu0 0
    %777 = vmatpush1.bf16.msra.mxu0 %v761
    %778 = vmatprep.subr.bf16.mxu0 0
    %779 = vmatpush1.bf16.msra.mxu0 %v760
    %780 = vmatprep.subr.bf16.mxu0 0
    %781 = vmatpush1.bf16.msra.mxu0 %v759
    %782 = vmatprep.subr.bf16.mxu0 0
    %783 = vmatpush1.bf16.msra.mxu0 %v758
    %784 = vmatprep.subr.bf16.mxu0 0
    %785 = vmatpush1.bf16.msra.mxu0 %v757
    %786 = vmatprep.subr.bf16.mxu0 0
    %787 = vmatpush1.bf16.msra.mxu0 %v756
    %788 = vmatprep.subr.bf16.mxu0 0
    %789 = vmatpush2.bf16.msra.mxu0 0
    %790 = vmatprep.subr.bf16.mxu0 0
    %791 = vmatpush2.bf16.msra.mxu0 0
    %792 = vmatprep.subr.bf16.mxu0 0
    %793 = vmatpush2.bf16.msra.mxu0 0
    %794 = vmatprep.subr.bf16.mxu0 0
    %795 = vmatpush2.bf16.msra.mxu0 0
    %796 = vmatprep.subr.bf16.mxu0 0
    %797 = vmatpush2.bf16.msra.mxu0 0
    %798 = vmatprep.subr.bf16.mxu0 0
    %799 = vmatpush2.bf16.msra.mxu0 0
    %800 = vmatprep.subr.bf16.mxu0 0
    %801 = vmatpush2.bf16.msra.mxu0 0
    %802 = vmatprep.subr.bf16.mxu0 0
    %803 = vmatpush2.bf16.msra.mxu0 0
    %804 = vmatprep.mubr.bf16.mxu0 0
    %805 = vmatmul.mubr.bf16.gmra.mxu0 %v717
    %v806 = vpop.f32.mrf.mxu0
    %v807 = vadd.f32 %v722, %v806
    %v808 = vpop.f32.mrf.mxu0
    %v809 = vpop.f32.mrf.mxu0
    %v810 = vpop.f32.mrf.mxu0
    %811 = vdwg.mxu0
    %v812 = vmax.f32 %v807, 0.0
    %v813 = vld [vmem:[%s5] sm:$0xf]
    %v814 = vld [vmem:[%s5 + $0x4] sm:$0xf]
    %v815 = vld [vmem:[%s5 + $0x8] sm:$0xf]
    %v816 = vld [vmem:[%s5 + $0xc] sm:$0xf]
    %v817 = vld [vmem:[%s5 + $0x10] sm:$0xf]
    %v818 = vld [vmem:[%s5 + $0x14] sm:$0xf]
    %v819 = vld [vmem:[%s5 + $0x18] sm:$0xf]
    %v820 = vld [vmem:[%s5 + $0x1c] sm:$0xf]
    %v821 = vld [vmem:[%s6] sm:$0x1]
    %v822 = vpack.c.bf16 %v812, %v812
    %v824 = vlaneseq
    %v825 = vshrl.u32 %v824, 7
    %v826 = vsub.s32 0, %v825
    %v827 = vrot.slane %v821, %v826
    %v837 = vunpack.c.l.b16 %v813
    %v838 = vunpack.c.l.b16 %v814
    %v839 = vunpack.c.l.b16 %v815
    %v840 = vunpack.c.l.b16 %v816
    %v841 = vunpack.c.l.b16 %v817
    %v842 = vunpack.c.l.b16 %v818
    %v843 = vunpack.c.l.b16 %v819
    %v844 = vunpack.c.l.b16 %v820
    %v845 = vpack.c.b16 %v838, %v837
    %v846 = vpack.c.b16 %v840, %v839
    %v847 = vpack.c.b16 %v842, %v841
    %v848 = vpack.c.b16 %v844, %v843
    %vm853 = vcmask 523264
    %v855 = vsel %vm853, %v822, 0
    %857 = vmatprep.subr.bf16.mxu0 0
    %858 = vmatpush1.bf16.msra.mxu0 0
    %859 = vmatprep.subr.bf16.mxu0 0
    %860 = vmatpush1.bf16.msra.mxu0 0
    %861 = vmatprep.subr.bf16.mxu0 0
    %862 = vmatpush1.bf16.msra.mxu0 0
    %863 = vmatprep.subr.bf16.mxu0 0
    %864 = vmatpush1.bf16.msra.mxu0 0
    %865 = vmatprep.subr.bf16.mxu0 0
    %866 = vmatpush1.bf16.msra.mxu0 %v848
    %867 = vmatprep.subr.bf16.mxu0 0
    %868 = vmatpush1.bf16.msra.mxu0 %v847
    %869 = vmatprep.subr.bf16.mxu0 0
    %870 = vmatpush1.bf16.msra.mxu0 %v846
    %871 = vmatprep.subr.bf16.mxu0 0
    %872 = vmatpush1.bf16.msra.mxu0 %v845
    %873 = vmatprep.subr.bf16.mxu0 0
    %874 = vmatpush2.bf16.msra.mxu0 0
    %875 = vmatprep.subr.bf16.mxu0 0
    %876 = vmatpush2.bf16.msra.mxu0 0
    %877 = vmatprep.subr.bf16.mxu0 0
    %878 = vmatpush2.bf16.msra.mxu0 0
    %879 = vmatprep.subr.bf16.mxu0 0
    %880 = vmatpush2.bf16.msra.mxu0 0
    %881 = vmatprep.subr.bf16.mxu0 0
    %882 = vmatpush2.bf16.msra.mxu0 0
    %883 = vmatprep.subr.bf16.mxu0 0
    %884 = vmatpush2.bf16.msra.mxu0 0
    %885 = vmatprep.subr.bf16.mxu0 0
    %886 = vmatpush2.bf16.msra.mxu0 0
    %887 = vmatprep.subr.bf16.mxu0 0
    %888 = vmatpush2.bf16.msra.mxu0 0
    %889 = vmatprep.mubr.bf16.mxu0 0
    %890 = vmatmul.mubr.bf16.gmra.mxu0 %v855
    %v891 = vpop.f32.mrf.mxu0
    %v892 = vadd.f32 %v827, %v891
    %v893 = vpop.f32.mrf.mxu0
    %v894 = vpop.f32.mrf.mxu0
    %v895 = vpop.f32.mrf.mxu0
    %896 = vdwg.mxu0
    %v897 = vmax.f32 %v892, 0.0
    %v898 = vld [vmem:[%s7] sm:$0xf]
    %v899 = vld [vmem:[%s7 + $0x4] sm:$0xf]
    %v900 = vld [vmem:[%s7 + $0x8] sm:$0xf]
    %v901 = vld [vmem:[%s7 + $0xc] sm:$0xf]
    %v902 = vld [vmem:[%s7 + $0x10] sm:$0x3]
    %v903 = vld [vmem:[%s8] sm:$0x1]
    %v904 = vpack.c.bf16 %v897, %v897
    %v906 = vlaneseq
    %v907 = vshrl.u32 %v906, 7
    %v908 = vsub.s32 0, %v907
    %v909 = vrot.slane %v903, %v908
    %v916 = vunpack.c.l.b16 %v898
    %v917 = vunpack.c.l.b16 %v899
    %v918 = vunpack.c.l.b16 %v900
    %v919 = vunpack.c.l.b16 %v901
    %v920 = vunpack.c.l.b16 %v902
    %v921 = vpack.c.b16 %v917, %v916
    %v922 = vpack.c.b16 %v919, %v918
    %v923 = vpack.c.b16 %v920, %v920
    %vm926 = vcmask 293888
    %v928 = vsel %vm926, %v904, 0
    %vm930 = vcmask 1041408
    %v932 = vsel %vm930, %v923, 0
    %934 = vmatprep.subr.bf16.mxu0 0
    %935 = vmatpush1.bf16.msra.mxu0 0
    %936 = vmatprep.subr.bf16.mxu0 0
    %937 = vmatpush1.bf16.msra.mxu0 0
    %938 = vmatprep.subr.bf16.mxu0 0
    %939 = vmatpush1.bf16.msra.mxu0 0
    %940 = vmatprep.subr.bf16.mxu0 0
    %941 = vmatpush1.bf16.msra.mxu0 0
    %942 = vmatprep.subr.bf16.mxu0 0
    %943 = vmatpush1.bf16.msra.mxu0 0
    %944 = vmatprep.subr.bf16.mxu0 0
    %945 = vmatpush1.bf16.msra.mxu0 %v932
    %946 = vmatprep.subr.bf16.mxu0 0
    %947 = vmatpush1.bf16.msra.mxu0 %v922
    %948 = vmatprep.subr.bf16.mxu0 0
    %949 = vmatpush1.bf16.msra.mxu0 %v921
    %950 = vmatprep.subr.bf16.mxu0 0
    %951 = vmatpush2.bf16.msra.mxu0 0
    %952 = vmatprep.subr.bf16.mxu0 0
    %953 = vmatpush2.bf16.msra.mxu0 0
    %954 = vmatprep.subr.bf16.mxu0 0
    %955 = vmatpush2.bf16.msra.mxu0 0
    %956 = vmatprep.subr.bf16.mxu0 0
    %957 = vmatpush2.bf16.msra.mxu0 0
    %958 = vmatprep.subr.bf16.mxu0 0
    %959 = vmatpush2.bf16.msra.mxu0 0
    %960 = vmatprep.subr.bf16.mxu0 0
    %961 = vmatpush2.bf16.msra.mxu0 0
    %962 = vmatprep.subr.bf16.mxu0 0
    %963 = vmatpush2.bf16.msra.mxu0 0
    %964 = vmatprep.subr.bf16.mxu0 0
    %965 = vmatpush2.bf16.msra.mxu0 0
    %966 = vmatprep.mubr.bf16.mxu0 0
    %967 = vmatmul.mubr.bf16.gmra.mxu0 %v928
    %v968 = vpop.f32.mrf.mxu0
    %v969 = vadd.f32 %v909, %v968
    %v970 = vpop.f32.mrf.mxu0
    %v971 = vpop.f32.mrf.mxu0
    %v972 = vpop.f32.mrf.mxu0
    %973 = vdwg.mxu0
    %v974 = vmax.f32 %v969, 0.0
    %v975 = vld [vmem:[%s9] sm:$0xf]
    %v976 = vld [vmem:[%s9 + $0x4] sm:$0xf]
    %v977 = vld [vmem:[%s9 + $0x8] sm:$0x1]
    %v978 = vld [vmem:[%s10] sm:$0x1]
    %v979 = vpack.c.bf16 %v974, %v974
    %v981 = vlaneseq
    %v982 = vshrl.u32 %v981, 7
    %v983 = vsub.s32 0, %v982
    %v984 = vrot.slane %v978, %v983
    %v989 = vunpack.c.l.b16 %v975
    %v990 = vunpack.c.l.b16 %v976
    %v991 = vunpack.c.l.b16 %v977
    %v992 = vpack.c.b16 %v990, %v989
    %v993 = vpack.c.b16 %v991, %v991
    %vm995 = vcmask 146432
    %v997 = vsel %vm995, %v979, 0
    %vm999 = vcmask 1040384
    %v1001 = vsel %vm999, %v993, 0
    %1003 = vmatprep.subr.bf16.mxu0 0
    %1004 = vmatpush1.bf16.msra.mxu0 0
    %1005 = vmatprep.subr.bf16.mxu0 0
    %1006 = vmatpush1.bf16.msra.mxu0 0
    %1007 = vmatprep.subr.bf16.mxu0 0
    %1008 = vmatpush1.bf16.msra.mxu0 0
    %1009 = vmatprep.subr.bf16.mxu0 0
    %1010 = vmatpush1.bf16.msra.mxu0 0
    %1011 = vmatprep.subr.bf16.mxu0 0
    %1012 = vmatpush1.bf16.msra.mxu0 0
    %1013 = vmatprep.subr.bf16.mxu0 0
    %1014 = vmatpush1.bf16.msra.mxu0 0
    %1015 = vmatprep.subr.bf16.mxu0 0
    %1016 = vmatpush1.bf16.msra.mxu0 %v1001
    %1017 = vmatprep.subr.bf16.mxu0 0
    %1018 = vmatpush1.bf16.msra.mxu0 %v992
    %1019 = vmatprep.subr.bf16.mxu0 0
    %1020 = vmatpush2.bf16.msra.mxu0 0
    %1021 = vmatprep.subr.bf16.mxu0 0
    %1022 = vmatpush2.bf16.msra.mxu0 0
    %1023 = vmatprep.subr.bf16.mxu0 0
    %1024 = vmatpush2.bf16.msra.mxu0 0
    %1025 = vmatprep.subr.bf16.mxu0 0
    %1026 = vmatpush2.bf16.msra.mxu0 0
    %1027 = vmatprep.subr.bf16.mxu0 0
    %1028 = vmatpush2.bf16.msra.mxu0 0
    %1029 = vmatprep.subr.bf16.mxu0 0
    %1030 = vmatpush2.bf16.msra.mxu0 0
    %1031 = vmatprep.subr.bf16.mxu0 0
    %1032 = vmatpush2.bf16.msra.mxu0 0
    %1033 = vmatprep.subr.bf16.mxu0 0
    %1034 = vmatpush2.bf16.msra.mxu0 0
    %1035 = vmatprep.mubr.bf16.mxu0 0
    %1036 = vmatmul.mubr.bf16.gmra.mxu0 %v997
    %v1037 = vpop.f32.mrf.mxu0
    %v1038 = vadd.f32 %v984, %v1037
    %v1039 = vpop.f32.mrf.mxu0
    %v1040 = vpop.f32.mrf.mxu0
    %v1041 = vpop.f32.mrf.mxu0
    %1042 = vdwg.mxu0
    %v1043 = vmax.f32 %v1038, 0.0
    %v1044 = vld [vmem:[%s11] sm:$0xf]
    %v1045 = vld [vmem:[%s11 + $0x4] sm:$0x1]
    %v1046 = vld [vmem:[%s12] sm:$0x1]
    %v1047 = vpack.c.bf16 %v1043, %v1043
    %v1049 = vlaneseq
    %v1050 = vshrl.u32 %v1049, 7
    %v1051 = vsub.s32 0, %v1050
    %v1052 = vrot.slane %v1046, %v1051
    %v1056 = vunpack.c.l.b16 %v1044
    %v1057 = vunpack.c.l.b16 %v1045
    %v1058 = vpack.c.b16 %v1057, %v1056
    %vm1059 = vcmask 72704
    %v1061 = vsel %vm1059, %v1047, 0
    %vm1063 = vcmask 1043456
    %vm1064 = vcmask 1044480
    %v1065 = vsel %vm1063, 4294967295, 65535
    %v1066 = vsel %vm1064, %v1065, 0
    %v1068 = vand.u32 %v1058, %v1066
    %1070 = vmatprep.subr.bf16.mxu0 0
    %1071 = vmatpush1.bf16.msra.mxu0 0
    %1072 = vmatprep.subr.bf16.mxu0 0
    %1073 = vmatpush1.bf16.msra.mxu0 0
    %1074 = vmatprep.subr.bf16.mxu0 0
    %1075 = vmatpush1.bf16.msra.mxu0 0
    %1076 = vmatprep.subr.bf16.mxu0 0
    %1077 = vmatpush1.bf16.msra.mxu0 0
    %1078 = vmatprep.subr.bf16.mxu0 0
    %1079 = vmatpush1.bf16.msra.mxu0 0
    %1080 = vmatprep.subr.bf16.mxu0 0
    %1081 = vmatpush1.bf16.msra.mxu0 0
    %1082 = vmatprep.subr.bf16.mxu0 0
    %1083 = vmatpush1.bf16.msra.mxu0 0
    %1084 = vmatprep.subr.bf16.mxu0 0
    %1085 = vmatpush1.bf16.msra.mxu0 %v1068
    %1086 = vmatprep.subr.bf16.mxu0 0
    %1087 = vmatpush2.bf16.msra.mxu0 0
    %1088 = vmatprep.subr.bf16.mxu0 0
    %1089 = vmatpush2.bf16.msra.mxu0 0
    %1090 = vmatprep.subr.bf16.mxu0 0
    %1091 = vmatpush2.bf16.msra.mxu0 0
    %1092 = vmatprep.subr.bf16.mxu0 0
    %1093 = vmatpush2.bf16.msra.mxu0 0
    %1094 = vmatprep.subr.bf16.mxu0 0
    %1095 = vmatpush2.bf16.msra.mxu0 0
    %1096 = vmatprep.subr.bf16.mxu0 0
    %1097 = vmatpush2.bf16.msra.mxu0 0
    %1098 = vmatprep.subr.bf16.mxu0 0
    %1099 = vmatpush2.bf16.msra.mxu0 0
    %1100 = vmatprep.subr.bf16.mxu0 0
    %1101 = vmatpush2.bf16.msra.mxu0 0
    %1102 = vmatprep.mubr.bf16.mxu0 0
    %1103 = vmatmul.mubr.bf16.gmra.mxu0 %v1061
    %v1104 = vpop.f32.mrf.mxu0
    %v1105 = vadd.f32 %v1052, %v1104
    %v1106 = vpop.f32.mrf.mxu0
    %v1107 = vpop.f32.mrf.mxu0
    %v1108 = vpop.f32.mrf.mxu0
    %1109 = vdwg.mxu0
    %v1110 = vmax.f32 %v1105, 0.0
    %v1111 = vld [vmem:[%s13] sm:$0xf]
    %v1112 = vld [vmem:[%s13 + $0x4] sm:$0xf]
    %v1113 = vld [vmem:[%s13 + $0x8] sm:$0x1]
    %v1114 = vld [vmem:[%s14] sm:$0x1]
    %v1115 = vpack.c.bf16 %v1110, %v1110
    %v1117 = vlaneseq
    %v1118 = vshrl.u32 %v1117, 7
    %v1119 = vsub.s32 0, %v1118
    %v1120 = vrot.slane %v1114, %v1119
    %v1125 = vunpack.c.l.b16 %v1111
    %v1126 = vunpack.c.l.b16 %v1112
    %v1127 = vunpack.c.l.b16 %v1113
    %v1128 = vpack.c.b16 %v1126, %v1125
    %v1129 = vpack.c.b16 %v1127, %v1127
    %v1132 = vsel %vm995, %v1115, 0
    %v1135 = vsel %vm999, %v1129, 0
    %1137 = vmatprep.subr.bf16.mxu0 0
    %1138 = vmatpush1.bf16.msra.mxu0 0
    %1139 = vmatprep.subr.bf16.mxu0 0
    %1140 = vmatpush1.bf16.msra.mxu0 0
    %1141 = vmatprep.subr.bf16.mxu0 0
    %1142 = vmatpush1.bf16.msra.mxu0 0
    %1143 = vmatprep.subr.bf16.mxu0 0
    %1144 = vmatpush1.bf16.msra.mxu0 0
    %1145 = vmatprep.subr.bf16.mxu0 0
    %1146 = vmatpush1.bf16.msra.mxu0 0
    %1147 = vmatprep.subr.bf16.mxu0 0
    %1148 = vmatpush1.bf16.msra.mxu0 0
    %1149 = vmatprep.subr.bf16.mxu0 0
    %1150 = vmatpush1.bf16.msra.mxu0 %v1135
    %1151 = vmatprep.subr.bf16.mxu0 0
    %1152 = vmatpush1.bf16.msra.mxu0 %v1128
    %1153 = vmatprep.subr.bf16.mxu0 0
    %1154 = vmatpush2.bf16.msra.mxu0 0
    %1155 = vmatprep.subr.bf16.mxu0 0
    %1156 = vmatpush2.bf16.msra.mxu0 0
    %1157 = vmatprep.subr.bf16.mxu0 0
    %1158 = vmatpush2.bf16.msra.mxu0 0
    %1159 = vmatprep.subr.bf16.mxu0 0
    %1160 = vmatpush2.bf16.msra.mxu0 0
    %1161 = vmatprep.subr.bf16.mxu0 0
    %1162 = vmatpush2.bf16.msra.mxu0 0
    %1163 = vmatprep.subr.bf16.mxu0 0
    %1164 = vmatpush2.bf16.msra.mxu0 0
    %1165 = vmatprep.subr.bf16.mxu0 0
    %1166 = vmatpush2.bf16.msra.mxu0 0
    %1167 = vmatprep.subr.bf16.mxu0 0
    %1168 = vmatpush2.bf16.msra.mxu0 0
    %1169 = vmatprep.mubr.bf16.mxu0 0
    %1170 = vmatmul.mubr.bf16.gmra.mxu0 %v1132
    %v1171 = vpop.f32.mrf.mxu0
    %v1172 = vadd.f32 %v1120, %v1171
    %v1173 = vpop.f32.mrf.mxu0
    %v1174 = vpop.f32.mrf.mxu0
    %v1175 = vpop.f32.mrf.mxu0
    %1176 = vdwg.mxu0
    %v1177 = vmax.f32 %v1172, 0.0
    %v1178 = vld [vmem:[%s15] sm:$0xf]
    %v1179 = vld [vmem:[%s15 + $0x4] sm:$0xf]
    %v1180 = vld [vmem:[%s15 + $0x8] sm:$0xf]
    %v1181 = vld [vmem:[%s15 + $0xc] sm:$0xf]
    %v1182 = vld [vmem:[%s15 + $0x10] sm:$0x3]
    %v1183 = vld [vmem:[%s16] sm:$0x1]
    %v1184 = vpack.c.bf16 %v1177, %v1177
    %v1186 = vlaneseq
    %v1187 = vshrl.u32 %v1186, 7
    %v1188 = vsub.s32 0, %v1187
    %v1189 = vrot.slane %v1183, %v1188
    %v1196 = vunpack.c.l.b16 %v1178
    %v1197 = vunpack.c.l.b16 %v1179
    %v1198 = vunpack.c.l.b16 %v1180
    %v1199 = vunpack.c.l.b16 %v1181
    %v1200 = vunpack.c.l.b16 %v1182
    %v1201 = vpack.c.b16 %v1197, %v1196
    %v1202 = vpack.c.b16 %v1199, %v1198
    %v1203 = vpack.c.b16 %v1200, %v1200
    %v1207 = vsel %vm926, %v1184, 0
    %v1210 = vsel %vm930, %v1203, 0
    %1212 = vmatprep.subr.bf16.mxu0 0
    %1213 = vmatpush1.bf16.msra.mxu0 0
    %1214 = vmatprep.subr.bf16.mxu0 0
    %1215 = vmatpush1.bf16.msra.mxu0 0
    %1216 = vmatprep.subr.bf16.mxu0 0
    %1217 = vmatpush1.bf16.msra.mxu0 0
    %1218 = vmatprep.subr.bf16.mxu0 0
    %1219 = vmatpush1.bf16.msra.mxu0 0
    %1220 = vmatprep.subr.bf16.mxu0 0
    %1221 = vmatpush1.bf16.msra.mxu0 0
    %1222 = vmatprep.subr.bf16.mxu0 0
    %1223 = vmatpush1.bf16.msra.mxu0 %v1210
    %1224 = vmatprep.subr.bf16.mxu0 0
    %1225 = vmatpush1.bf16.msra.mxu0 %v1202
    %1226 = vmatprep.subr.bf16.mxu0 0
    %1227 = vmatpush1.bf16.msra.mxu0 %v1201
    %1228 = vmatprep.subr.bf16.mxu0 0
    %1229 = vmatpush2.bf16.msra.mxu0 0
    %1230 = vmatprep.subr.bf16.mxu0 0
    %1231 = vmatpush2.bf16.msra.mxu0 0
    %1232 = vmatprep.subr.bf16.mxu0 0
    %1233 = vmatpush2.bf16.msra.mxu0 0
    %1234 = vmatprep.subr.bf16.mxu0 0
    %1235 = vmatpush2.bf16.msra.mxu0 0
    %1236 = vmatprep.subr.bf16.mxu0 0
    %1237 = vmatpush2.bf16.msra.mxu0 0
    %1238 = vmatprep.subr.bf16.mxu0 0
    %1239 = vmatpush2.bf16.msra.mxu0 0
    %1240 = vmatprep.subr.bf16.mxu0 0
    %1241 = vmatpush2.bf16.msra.mxu0 0
    %1242 = vmatprep.subr.bf16.mxu0 0
    %1243 = vmatpush2.bf16.msra.mxu0 0
    %1244 = vmatprep.mubr.bf16.mxu0 0
    %1245 = vmatmul.mubr.bf16.gmra.mxu0 %v1207
    %v1246 = vpop.f32.mrf.mxu0
    %v1247 = vadd.f32 %v1189, %v1246
    %v1248 = vpop.f32.mrf.mxu0
    %v1249 = vpop.f32.mrf.mxu0
    %v1250 = vpop.f32.mrf.mxu0
    %1251 = vdwg.mxu0
    %v1252 = vmax.f32 %v1247, 0.0
    %v1253 = vld [vmem:[%s17] sm:$0xf]
    %v1254 = vld [vmem:[%s17 + $0x4] sm:$0xf]
    %v1255 = vld [vmem:[%s17 + $0x8] sm:$0xf]
    %v1256 = vld [vmem:[%s17 + $0xc] sm:$0xf]
    %v1257 = vld [vmem:[%s17 + $0x10] sm:$0xf]
    %v1258 = vld [vmem:[%s17 + $0x14] sm:$0xf]
    %v1259 = vld [vmem:[%s17 + $0x18] sm:$0xf]
    %v1260 = vld [vmem:[%s17 + $0x1c] sm:$0xf]
    %v1261 = vld [vmem:[%s18] sm:$0x1]
    %v1262 = vpack.c.bf16 %v1252, %v1252
    %v1264 = vlaneseq
    %v1265 = vshrl.u32 %v1264, 7
    %v1266 = vsub.s32 0, %v1265
    %v1267 = vrot.slane %v1261, %v1266
    %v1277 = vunpack.c.l.b16 %v1253
    %v1278 = vunpack.c.l.b16 %v1254
    %v1279 = vunpack.c.l.b16 %v1255
    %v1280 = vunpack.c.l.b16 %v1256
    %v1281 = vunpack.c.l.b16 %v1257
    %v1282 = vunpack.c.l.b16 %v1258
    %v1283 = vunpack.c.l.b16 %v1259
    %v1284 = vunpack.c.l.b16 %v1260
    %v1285 = vpack.c.b16 %v1278, %v1277
    %v1286 = vpack.c.b16 %v1280, %v1279
    %v1287 = vpack.c.b16 %v1282, %v1281
    %v1288 = vpack.c.b16 %v1284, %v1283
    %v1294 = vsel %vm853, %v1262, 0
    %1296 = vmatprep.subr.bf16.mxu0 0
    %1297 = vmatpush1.bf16.msra.mxu0 0
    %1298 = vmatprep.subr.bf16.mxu0 0
    %1299 = vmatpush1.bf16.msra.mxu0 0
    %1300 = vmatprep.subr.bf16.mxu0 0
    %1301 = vmatpush1.bf16.msra.mxu0 0
    %1302 = vmatprep.subr.bf16.mxu0 0
    %1303 = vmatpush1.bf16.msra.mxu0 0
    %1304 = vmatprep.subr.bf16.mxu0 0
    %1305 = vmatpush1.bf16.msra.mxu0 %v1288
    %1306 = vmatprep.subr.bf16.mxu0 0
    %1307 = vmatpush1.bf16.msra.mxu0 %v1287
    %1308 = vmatprep.subr.bf16.mxu0 0
    %1309 = vmatpush1.bf16.msra.mxu0 %v1286
    %1310 = vmatprep.subr.bf16.mxu0 0
    %1311 = vmatpush1.bf16.msra.mxu0 %v1285
    %1312 = vmatprep.subr.bf16.mxu0 0
    %1313 = vmatpush2.bf16.msra.mxu0 0
    %1314 = vmatprep.subr.bf16.mxu0 0
    %1315 = vmatpush2.bf16.msra.mxu0 0
    %1316 = vmatprep.subr.bf16.mxu0 0
    %1317 = vmatpush2.bf16.msra.mxu0 0
    %1318 = vmatprep.subr.bf16.mxu0 0
    %1319 = vmatpush2.bf16.msra.mxu0 0
    %1320 = vmatprep.subr.bf16.mxu0 0
    %1321 = vmatpush2.bf16.msra.mxu0 0
    %1322 = vmatprep.subr.bf16.mxu0 0
    %1323 = vmatpush2.bf16.msra.mxu0 0
    %1324 = vmatprep.subr.bf16.mxu0 0
    %1325 = vmatpush2.bf16.msra.mxu0 0
    %1326 = vmatprep.subr.bf16.mxu0 0
    %1327 = vmatpush2.bf16.msra.mxu0 0
    %1328 = vmatprep.mubr.bf16.mxu0 0
    %1329 = vmatmul.mubr.bf16.gmra.mxu0 %v1294
    %v1330 = vpop.f32.mrf.mxu0
    %v1331 = vadd.f32 %v1267, %v1330
    %v1332 = vpop.f32.mrf.mxu0
    %v1333 = vpop.f32.mrf.mxu0
    %v1334 = vpop.f32.mrf.mxu0
    %1335 = vdwg.mxu0
    %v1336 = vmax.f32 %v1331, 0.0
    %v1337 = vld [vmem:[%s19] sm:$0xff]
    %v1338 = vld [vmem:[%s19 + $0x8] sm:$0xff]
    %v1339 = vld [vmem:[%s19 + $0x10] sm:$0xff]
    %v1340 = vld [vmem:[%s19 + $0x18] sm:$0xf]
    %v1341 = vld [vmem:[%s19 + $0x1c] sm:$0xff]
    %v1342 = vld [vmem:[%s19 + $0x24] sm:$0xff]
    %v1343 = vld [vmem:[%s19 + $0x2c] sm:$0xff]
    %v1344 = vld [vmem:[%s19 + $0x34] sm:$0xf]
    %v1345 = vld [vmem:[%s19 + $0x38] sm:$0xff]
    %v1346 = vld [vmem:[%s19 + $0x40] sm:$0xff]
    %v1347 = vld [vmem:[%s19 + $0x48] sm:$0xff]
    %v1348 = vld [vmem:[%s19 + $0x50] sm:$0xf]
    %v1349 = vld [vmem:[%s19 + $0x54] sm:$0xff]
    %v1350 = vld [vmem:[%s19 + $0x5c] sm:$0xff]
    %v1351 = vld [vmem:[%s19 + $0x64] sm:$0xff]
    %v1352 = vld [vmem:[%s19 + $0x6c] sm:$0xf]
    %v1353 = vld [vmem:[%s19 + $0x70] sm:$0xff]
    %v1354 = vld [vmem:[%s19 + $0x78] sm:$0xff]
    %v1355 = vld [vmem:[%s19 + $0x80] sm:$0xff]
    %v1356 = vld [vmem:[%s19 + $0x88] sm:$0xf]
    %v1357 = vld [vmem:[%s19 + $0x8c] sm:$0xff]
    %v1358 = vld [vmem:[%s19 + $0x94] sm:$0xff]
    %v1359 = vld [vmem:[%s19 + $0x9c] sm:$0xff]
    %v1360 = vld [vmem:[%s19 + $0xa4] sm:$0xf]
    %v1361 = vld [vmem:[%s19 + $0xa8] sm:$0xff]
    %v1362 = vld [vmem:[%s19 + $0xb0] sm:$0xff]
    %v1363 = vld [vmem:[%s19 + $0xb8] sm:$0xff]
    %v1364 = vld [vmem:[%s19 + $0xc0] sm:$0xf]
    %v1365 = vld [vmem:[%s19 + $0xc4] sm:$0xff]
    %v1366 = vld [vmem:[%s19 + $0xcc] sm:$0xff]
    %v1367 = vld [vmem:[%s19 + $0xd4] sm:$0xff]
    %v1368 = vld [vmem:[%s19 + $0xdc] sm:$0xf]
    %v1369 = vld [vmem:[%s19 + $0xe0] sm:$0xff]
    %v1370 = vld [vmem:[%s19 + $0xe8] sm:$0xff]
    %v1371 = vld [vmem:[%s19 + $0xf0] sm:$0xff]
    %v1372 = vld [vmem:[%s19 + $0xf8] sm:$0xf]
    %v1373 = vld [vmem:[%s19 + $0xfc] sm:$0xff]
    %v1374 = vld [vmem:[%s19 + $0x104] sm:$0xff]
    %v1375 = vld [vmem:[%s19 + $0x10c] sm:$0xff]
    %v1376 = vld [vmem:[%s19 + $0x114] sm:$0xf]
    %v1377 = vld [vmem:[%s19 + $0x118] sm:$0xff]
    %v1378 = vld [vmem:[%s19 + $0x120] sm:$0xff]
    %v1379 = vld [vmem:[%s19 + $0x128] sm:$0xff]
    %v1380 = vld [vmem:[%s19 + $0x130] sm:$0xf]
    %v1381 = vld [vmem:[%s19 + $0x134] sm:$0xff]
    %v1382 = vld [vmem:[%s19 + $0x13c] sm:$0xff]
    %v1383 = vld [vmem:[%s19 + $0x144] sm:$0xff]
    %v1384 = vld [vmem:[%s19 + $0x14c] sm:$0xf]
    %v1385 = vld [vmem:[%s19 + $0x150] sm:$0xff]
    %v1386 = vld [vmem:[%s19 + $0x158] sm:$0xff]
    %v1387 = vld [vmem:[%s19 + $0x160] sm:$0xff]
    %v1388 = vld [vmem:[%s19 + $0x168] sm:$0xf]
    %v1389 = vld [vmem:[%s19 + $0x16c] sm:$0xff]
    %v1390 = vld [vmem:[%s19 + $0x174] sm:$0xff]
    %v1391 = vld [vmem:[%s19 + $0x17c] sm:$0xff]
    %v1392 = vld [vmem:[%s19 + $0x184] sm:$0xf]
    %v1393 = vld [vmem:[%s19 + $0x188] sm:$0xff]
    %v1394 = vld [vmem:[%s19 + $0x190] sm:$0xff]
    %v1395 = vld [vmem:[%s19 + $0x198] sm:$0xff]
    %v1396 = vld [vmem:[%s19 + $0x1a0] sm:$0xf]
    %v1397 = vld [vmem:[%s19 + $0x1a4] sm:$0xff]
    %v1398 = vld [vmem:[%s19 + $0x1ac] sm:$0xff]
    %v1399 = vld [vmem:[%s19 + $0x1b4] sm:$0xff]
    %v1400 = vld [vmem:[%s19 + $0x1bc] sm:$0xf]
    %v1401 = vld [vmem:[%s20] sm:$0xff]
    %v1402 = vpack.c.bf16 %v1336, %v1336
    %v1404 = vlaneseq
    %v1405 = vshrl.u32 %v1404, 7
    %v1406 = vsub.s32 0, %v1405
    %v1407 = vrot.slane %v1401, %v1406
    %v1408 = vlaneseq
    %v1409 = vshrl.u32 %v1408, 7
    %v1410 = vsub.s32 1, %v1409
    %v1411 = vrot.slane %v1401, %v1410
    %v1412 = vlaneseq
    %v1413 = vshrl.u32 %v1412, 7
    %v1414 = vsub.s32 2, %v1413
    %v1415 = vrot.slane %v1401, %v1414
    %v1416 = vlaneseq
    %v1417 = vshrl.u32 %v1416, 7
    %v1418 = vsub.s32 3, %v1417
    %v1419 = vrot.slane %v1401, %v1418
    %v1420 = vlaneseq
    %v1421 = vshrl.u32 %v1420, 7
    %v1422 = vsub.s32 4, %v1421
    %v1423 = vrot.slane %v1401, %v1422
    %v1424 = vlaneseq
    %v1425 = vshrl.u32 %v1424, 7
    %v1426 = vsub.s32 5, %v1425
    %v1427 = vrot.slane %v1401, %v1426
    %v1428 = vlaneseq
    %v1429 = vshrl.u32 %v1428, 7
    %v1430 = vsub.s32 6, %v1429
    %v1431 = vrot.slane %v1401, %v1430
    %v1503 = vunpack.c.l.b16 %v1337
    %v1504 = vunpack.c.h.b16 %v1337
    %v1505 = vunpack.c.l.b16 %v1338
    %v1506 = vunpack.c.h.b16 %v1338
    %v1507 = vunpack.c.l.b16 %v1339
    %v1508 = vunpack.c.h.b16 %v1339
    %v1509 = vunpack.c.l.b16 %v1340
    %v1510 = vunpack.c.l.b16 %v1341
    %v1511 = vunpack.c.h.b16 %v1341
    %v1512 = vunpack.c.l.b16 %v1342
    %v1513 = vunpack.c.h.b16 %v1342
    %v1514 = vunpack.c.l.b16 %v1343
    %v1515 = vunpack.c.h.b16 %v1343
    %v1516 = vunpack.c.l.b16 %v1344
    %v1517 = vunpack.c.l.b16 %v1345
    %v1518 = vunpack.c.h.b16 %v1345
    %v1519 = vunpack.c.l.b16 %v1346
    %v1520 = vunpack.c.h.b16 %v1346
    %v1521 = vunpack.c.l.b16 %v1347
    %v1522 = vunpack.c.h.b16 %v1347
    %v1523 = vunpack.c.l.b16 %v1348
    %v1524 = vunpack.c.l.b16 %v1349
    %v1525 = vunpack.c.h.b16 %v1349
    %v1526 = vunpack.c.l.b16 %v1350
    %v1527 = vunpack.c.h.b16 %v1350
    %v1528 = vunpack.c.l.b16 %v1351
    %v1529 = vunpack.c.h.b16 %v1351
    %v1530 = vunpack.c.l.b16 %v1352
    %v1531 = vunpack.c.l.b16 %v1353
    %v1532 = vunpack.c.h.b16 %v1353
    %v1533 = vunpack.c.l.b16 %v1354
    %v1534 = vunpack.c.h.b16 %v1354
    %v1535 = vunpack.c.l.b16 %v1355
    %v1536 = vunpack.c.h.b16 %v1355
    %v1537 = vunpack.c.l.b16 %v1356
    %v1538 = vunpack.c.l.b16 %v1357
    %v1539 = vunpack.c.h.b16 %v1357
    %v1540 = vunpack.c.l.b16 %v1358
    %v1541 = vunpack.c.h.b16 %v1358
    %v1542 = vunpack.c.l.b16 %v1359
    %v1543 = vunpack.c.h.b16 %v1359
    %v1544 = vunpack.c.l.b16 %v1360
    %v1545 = vunpack.c.l.b16 %v1361
    %v1546 = vunpack.c.h.b16 %v1361
    %v1547 = vunpack.c.l.b16 %v1362
    %v1548 = vunpack.c.h.b16 %v1362
    %v1549 = vunpack.c.l.b16 %v1363
    %v1550 = vunpack.c.h.b16 %v1363
    %v1551 = vunpack.c.l.b16 %v1364
    %v1552 = vunpack.c.l.b16 %v1365
    %v1553 = vunpack.c.h.b16 %v1365
    %v1554 = vunpack.c.l.b16 %v1366
    %v1555 = vunpack.c.h.b16 %v1366
    %v1556 = vunpack.c.l.b16 %v1367
    %v1557 = vunpack.c.h.b16 %v1367
    %v1558 = vunpack.c.l.b16 %v1368
    %v1559 = vunpack.c.l.b16 %v1369
    %v1560 = vunpack.c.h.b16 %v1369
    %v1561 = vunpack.c.l.b16 %v1370
    %v1562 = vunpack.c.h.b16 %v1370
    %v1563 = vunpack.c.l.b16 %v1371
    %v1564 = vunpack.c.h.b16 %v1371
    %v1565 = vunpack.c.l.b16 %v1372
    %v1566 = vunpack.c.l.b16 %v1373
    %v1567 = vunpack.c.h.b16 %v1373
    %v1568 = vunpack.c.l.b16 %v1374
    %v1569 = vunpack.c.h.b16 %v1374
    %v1570 = vunpack.c.l.b16 %v1375
    %v1571 = vunpack.c.h.b16 %v1375
    %v1572 = vunpack.c.l.b16 %v1376
    %v1573 = vunpack.c.l.b16 %v1377
    %v1574 = vunpack.c.h.b16 %v1377
    %v1575 = vunpack.c.l.b16 %v1378
    %v1576 = vunpack.c.h.b16 %v1378
    %v1577 = vunpack.c.l.b16 %v1379
    %v1578 = vunpack.c.h.b16 %v1379
    %v1579 = vunpack.c.l.b16 %v1380
    %v1580 = vunpack.c.l.b16 %v1381
    %v1581 = vunpack.c.h.b16 %v1381
    %v1582 = vunpack.c.l.b16 %v1382
    %v1583 = vunpack.c.h.b16 %v1382
    %v1584 = vunpack.c.l.b16 %v1383
    %v1585 = vunpack.c.h.b16 %v1383
    %v1586 = vunpack.c.l.b16 %v1384
    %v1587 = vunpack.c.l.b16 %v1385
    %v1588 = vunpack.c.h.b16 %v1385
    %v1589 = vunpack.c.l.b16 %v1386
    %v1590 = vunpack.c.h.b16 %v1386
    %v1591 = vunpack.c.l.b16 %v1387
    %v1592 = vunpack.c.h.b16 %v1387
    %v1593 = vunpack.c.l.b16 %v1388
    %v1594 = vunpack.c.l.b16 %v1389
    %v1595 = vunpack.c.h.b16 %v1389
    %v1596 = vunpack.c.l.b16 %v1390
    %v1597 = vunpack.c.h.b16 %v1390
    %v1598 = vunpack.c.l.b16 %v1391
    %v1599 = vunpack.c.h.b16 %v1391
    %v1600 = vunpack.c.l.b16 %v1392
    %v1601 = vunpack.c.l.b16 %v1393
    %v1602 = vunpack.c.h.b16 %v1393
    %v1603 = vunpack.c.l.b16 %v1394
    %v1604 = vunpack.c.h.b16 %v1394
    %v1605 = vunpack.c.l.b16 %v1395
    %v1606 = vunpack.c.h.b16 %v1395
    %v1607 = vunpack.c.l.b16 %v1396
    %v1608 = vunpack.c.l.b16 %v1397
    %v1609 = vunpack.c.h.b16 %v1397
    %v1610 = vunpack.c.l.b16 %v1398
    %v1611 = vunpack.c.h.b16 %v1398
    %v1612 = vunpack.c.l.b16 %v1399
    %v1613 = vunpack.c.h.b16 %v1399
    %v1614 = vunpack.c.l.b16 %v1400
    %v1615 = vpack.c.b16 %v1510, %v1503
    %v1616 = vpack.c.b16 %v1511, %v1504
    %v1617 = vpack.c.b16 %v1512, %v1505
    %v1618 = vpack.c.b16 %v1513, %v1506
    %v1619 = vpack.c.b16 %v1514, %v1507
    %v1620 = vpack.c.b16 %v1515, %v1508
    %v1621 = vpack.c.b16 %v1516, %v1509
    %v1622 = vpack.c.b16 %v1524, %v1517
    %v1623 = vpack.c.b16 %v1525, %v1518
    %v1624 = vpack.c.b16 %v1526, %v1519
    %v1625 = vpack.c.b16 %v1527, %v1520
    %v1626 = vpack.c.b16 %v1528, %v1521
    %v1627 = vpack.c.b16 %v1529, %v1522
    %v1628 = vpack.c.b16 %v1530, %v1523
    %v1629 = vpack.c.b16 %v1538, %v1531
    %v1630 = vpack.c.b16 %v1539, %v1532
    %v1631 = vpack.c.b16 %v1540, %v1533
    %v1632 = vpack.c.b16 %v1541, %v1534
    %v1633 = vpack.c.b16 %v1542, %v1535
    %v1634 = vpack.c.b16 %v1543, %v1536
    %v1635 = vpack.c.b16 %v1544, %v1537
    %v1636 = vpack.c.b16 %v1552, %v1545
    %v1637 = vpack.c.b16 %v1553, %v1546
    %v1638 = vpack.c.b16 %v1554, %v1547
    %v1639 = vpack.c.b16 %v1555, %v1548
    %v1640 = vpack.c.b16 %v1556, %v1549
    %v1641 = vpack.c.b16 %v1557, %v1550
    %v1642 = vpack.c.b16 %v1558, %v1551
    %v1643 = vpack.c.b16 %v1566, %v1559
    %v1644 = vpack.c.b16 %v1567, %v1560
    %v1645 = vpack.c.b16 %v1568, %v1561
    %v1646 = vpack.c.b16 %v1569, %v1562
    %v1647 = vpack.c.b16 %v1570, %v1563
    %v1648 = vpack.c.b16 %v1571, %v1564
    %v1649 = vpack.c.b16 %v1572, %v1565
    %v1650 = vpack.c.b16 %v1580, %v1573
    %v1651 = vpack.c.b16 %v1581, %v1574
    %v1652 = vpack.c.b16 %v1582, %v1575
    %v1653 = vpack.c.b16 %v1583, %v1576
    %v1654 = vpack.c.b16 %v1584, %v1577
    %v1655 = vpack.c.b16 %v1585, %v1578
    %v1656 = vpack.c.b16 %v1586, %v1579
    %v1657 = vpack.c.b16 %v1594, %v1587
    %v1658 = vpack.c.b16 %v1595, %v1588
    %v1659 = vpack.c.b16 %v1596, %v1589
    %v1660 = vpack.c.b16 %v1597, %v1590
    %v1661 = vpack.c.b16 %v1598, %v1591
    %v1662 = vpack.c.b16 %v1599, %v1592
    %v1663 = vpack.c.b16 %v1600, %v1593
    %v1664 = vpack.c.b16 %v1608, %v1601
    %v1665 = vpack.c.b16 %v1609, %v1602
    %v1666 = vpack.c.b16 %v1610, %v1603
    %v1667 = vpack.c.b16 %v1611, %v1604
    %v1668 = vpack.c.b16 %v1612, %v1605
    %v1669 = vpack.c.b16 %v1613, %v1606
    %v1670 = vpack.c.b16 %v1614, %v1607
    %1727 = vmatprep.subr.bf16.mxu0 %v1665
    %1728 = vmatpush1.bf16.msra.mxu0 %v1664
    %1729 = vmatprep.subr.bf16.mxu0 %v1658
    %1730 = vmatpush1.bf16.msra.mxu0 %v1657
    %1731 = vmatprep.subr.bf16.mxu0 %v1651
    %1732 = vmatpush1.bf16.msra.mxu0 %v1650
    %1733 = vmatprep.subr.bf16.mxu0 %v1644
    %1734 = vmatpush1.bf16.msra.mxu0 %v1643
    %1735 = vmatprep.subr.bf16.mxu0 %v1637
    %1736 = vmatpush1.bf16.msra.mxu0 %v1636
    %1737 = vmatprep.subr.bf16.mxu0 %v1630
    %1738 = vmatpush1.bf16.msra.mxu0 %v1629
    %1739 = vmatprep.subr.bf16.mxu0 %v1623
    %1740 = vmatpush1.bf16.msra.mxu0 %v1622
    %1741 = vmatprep.subr.bf16.mxu0 %v1616
    %1742 = vmatpush1.bf16.msra.mxu0 %v1615
    %1743 = vmatprep.subr.bf16.mxu0 0
    %1744 = vmatpush2.bf16.msra.mxu0 0
    %1745 = vmatprep.subr.bf16.mxu0 0
    %1746 = vmatpush2.bf16.msra.mxu0 0
    %1747 = vmatprep.subr.bf16.mxu0 0
    %1748 = vmatpush2.bf16.msra.mxu0 0
    %1749 = vmatprep.subr.bf16.mxu0 0
    %1750 = vmatpush2.bf16.msra.mxu0 0
    %1751 = vmatprep.subr.bf16.mxu0 0
    %1752 = vmatpush2.bf16.msra.mxu0 0
    %1753 = vmatprep.subr.bf16.mxu0 0
    %1754 = vmatpush2.bf16.msra.mxu0 0
    %1755 = vmatprep.subr.bf16.mxu0 0
    %1756 = vmatpush2.bf16.msra.mxu0 0
    %1757 = vmatprep.subr.bf16.mxu0 0
    %1758 = vmatpush2.bf16.msra.mxu0 0
    %1759 = vmatprep.mubr.bf16.mxu0 0
    %1760 = vmatmul.mubr.bf16.gmra.mxu0 %v1402
    %v1761 = vpop.f32.mrf.mxu0
    %v1762 = vadd.f32 %v1407, %v1761
    %v1763 = vpop.f32.mrf.mxu0
    %v1764 = vadd.f32 %v1411, %v1763
    %v1765 = vpop.f32.mrf.mxu0
    %v1766 = vpop.f32.mrf.mxu0
    %1767 = vdwg.mxu0
    %1768 = vmatprep.subr.bf16.mxu0 %v1667
    %1769 = vmatpush1.bf16.msra.mxu0 %v1666
    %1770 = vmatprep.subr.bf16.mxu0 %v1660
    %1771 = vmatpush1.bf16.msra.mxu0 %v1659
    %1772 = vmatprep.subr.bf16.mxu0 %v1653
    %1773 = vmatpush1.bf16.msra.mxu0 %v1652
    %1774 = vmatprep.subr.bf16.mxu0 %v1646
    %1775 = vmatpush1.bf16.msra.mxu0 %v1645
    %1776 = vmatprep.subr.bf16.mxu0 %v1639
    %1777 = vmatpush1.bf16.msra.mxu0 %v1638
    %1778 = vmatprep.subr.bf16.mxu0 %v1632
    %1779 = vmatpush1.bf16.msra.mxu0 %v1631
    %1780 = vmatprep.subr.bf16.mxu0 %v1625
    %1781 = vmatpush1.bf16.msra.mxu0 %v1624
    %1782 = vmatprep.subr.bf16.mxu0 %v1618
    %1783 = vmatpush1.bf16.msra.mxu0 %v1617
    %1784 = vmatprep.subr.bf16.mxu0 0
    %1785 = vmatpush2.bf16.msra.mxu0 0
    %1786 = vmatprep.subr.bf16.mxu0 0
    %1787 = vmatpush2.bf16.msra.mxu0 0
    %1788 = vmatprep.subr.bf16.mxu0 0
    %1789 = vmatpush2.bf16.msra.mxu0 0
    %1790 = vmatprep.subr.bf16.mxu0 0
    %1791 = vmatpush2.bf16.msra.mxu0 0
    %1792 = vmatprep.subr.bf16.mxu0 0
    %1793 = vmatpush2.bf16.msra.mxu0 0
    %1794 = vmatprep.subr.bf16.mxu0 0
    %1795 = vmatpush2.bf16.msra.mxu0 0
    %1796 = vmatprep.subr.bf16.mxu0 0
    %1797 = vmatpush2.bf16.msra.mxu0 0
    %1798 = vmatprep.subr.bf16.mxu0 0
    %1799 = vmatpush2.bf16.msra.mxu0 0
    %1800 = vmatprep.mubr.bf16.mxu0 0
    %1801 = vmatmul.mubr.bf16.gmra.mxu0 %v1402
    %v1802 = vpop.f32.mrf.mxu0
    %v1803 = vadd.f32 %v1415, %v1802
    %v1804 = vpop.f32.mrf.mxu0
    %v1805 = vadd.f32 %v1419, %v1804
    %v1806 = vpop.f32.mrf.mxu0
    %v1807 = vpop.f32.mrf.mxu0
    %1808 = vdwg.mxu0
    %1809 = vmatprep.subr.bf16.mxu0 %v1669
    %1810 = vmatpush1.bf16.msra.mxu0 %v1668
    %1811 = vmatprep.subr.bf16.mxu0 %v1662
    %1812 = vmatpush1.bf16.msra.mxu0 %v1661
    %1813 = vmatprep.subr.bf16.mxu0 %v1655
    %1814 = vmatpush1.bf16.msra.mxu0 %v1654
    %1815 = vmatprep.subr.bf16.mxu0 %v1648
    %1816 = vmatpush1.bf16.msra.mxu0 %v1647
    %1817 = vmatprep.subr.bf16.mxu0 %v1641
    %1818 = vmatpush1.bf16.msra.mxu0 %v1640
    %1819 = vmatprep.subr.bf16.mxu0 %v1634
    %1820 = vmatpush1.bf16.msra.mxu0 %v1633
    %1821 = vmatprep.subr.bf16.mxu0 %v1627
    %1822 = vmatpush1.bf16.msra.mxu0 %v1626
    %1823 = vmatprep.subr.bf16.mxu0 %v1620
    %1824 = vmatpush1.bf16.msra.mxu0 %v1619
    %1825 = vmatprep.subr.bf16.mxu0 0
    %1826 = vmatpush2.bf16.msra.mxu0 0
    %1827 = vmatprep.subr.bf16.mxu0 0
    %1828 = vmatpush2.bf16.msra.mxu0 0
    %1829 = vmatprep.subr.bf16.mxu0 0
    %1830 = vmatpush2.bf16.msra.mxu0 0
    %1831 = vmatprep.subr.bf16.mxu0 0
    %1832 = vmatpush2.bf16.msra.mxu0 0
    %1833 = vmatprep.subr.bf16.mxu0 0
    %1834 = vmatpush2.bf16.msra.mxu0 0
    %1835 = vmatprep.subr.bf16.mxu0 0
    %1836 = vmatpush2.bf16.msra.mxu0 0
    %1837 = vmatprep.subr.bf16.mxu0 0
    %1838 = vmatpush2.bf16.msra.mxu0 0
    %1839 = vmatprep.subr.bf16.mxu0 0
    %1840 = vmatpush2.bf16.msra.mxu0 0
    %1841 = vmatprep.mubr.bf16.mxu0 0
    %1842 = vmatmul.mubr.bf16.gmra.mxu0 %v1402
    %v1843 = vpop.f32.mrf.mxu0
    %v1844 = vadd.f32 %v1423, %v1843
    %v1845 = vpop.f32.mrf.mxu0
    %v1846 = vadd.f32 %v1427, %v1845
    %v1847 = vpop.f32.mrf.mxu0
    %v1848 = vpop.f32.mrf.mxu0
    %1849 = vdwg.mxu0
    %1850 = vmatprep.subr.bf16.mxu0 0
    %1851 = vmatpush1.bf16.msra.mxu0 %v1670
    %1852 = vmatprep.subr.bf16.mxu0 0
    %1853 = vmatpush1.bf16.msra.mxu0 %v1663
    %1854 = vmatprep.subr.bf16.mxu0 0
    %1855 = vmatpush1.bf16.msra.mxu0 %v1656
    %1856 = vmatprep.subr.bf16.mxu0 0
    %1857 = vmatpush1.bf16.msra.mxu0 %v1649
    %1858 = vmatprep.subr.bf16.mxu0 0
    %1859 = vmatpush1.bf16.msra.mxu0 %v1642
    %1860 = vmatprep.subr.bf16.mxu0 0
    %1861 = vmatpush1.bf16.msra.mxu0 %v1635
    %1862 = vmatprep.subr.bf16.mxu0 0
    %1863 = vmatpush1.bf16.msra.mxu0 %v1628
    %1864 = vmatprep.subr.bf16.mxu0 0
    %1865 = vmatpush1.bf16.msra.mxu0 %v1621
    %1866 = vmatprep.subr.bf16.mxu0 0
    %1867 = vmatpush2.bf16.msra.mxu0 0
    %1868 = vmatprep.subr.bf16.mxu0 0
    %1869 = vmatpush2.bf16.msra.mxu0 0
    %1870 = vmatprep.subr.bf16.mxu0 0
    %1871 = vmatpush2.bf16.msra.mxu0 0
    %1872 = vmatprep.subr.bf16.mxu0 0
    %1873 = vmatpush2.bf16.msra.mxu0 0
    %1874 = vmatprep.subr.bf16.mxu0 0
    %1875 = vmatpush2.bf16.msra.mxu0 0
    %1876 = vmatprep.subr.bf16.mxu0 0
    %1877 = vmatpush2.bf16.msra.mxu0 0
    %1878 = vmatprep.subr.bf16.mxu0 0
    %1879 = vmatpush2.bf16.msra.mxu0 0
    %1880 = vmatprep.subr.bf16.mxu0 0
    %1881 = vmatpush2.bf16.msra.mxu0 0
    %1882 = vmatprep.mubr.bf16.mxu0 0
    %1883 = vmatmul.mubr.bf16.gmra.mxu0 %v1402
    %v1884 = vpop.f32.mrf.mxu0
    %v1885 = vadd.f32 %v1431, %v1884
    %v1886 = vpop.f32.mrf.mxu0
    %v1887 = vpop.f32.mrf.mxu0
    %v1888 = vpop.f32.mrf.mxu0
    %1889 = vdwg.mxu0
    %v1890 = vxor.u32 %v1762, 2147483648
    %v1891 = vxor.u32 %v1764, 2147483648
    %v1892 = vxor.u32 %v1803, 2147483648
    %v1893 = vxor.u32 %v1805, 2147483648
    %v1894 = vxor.u32 %v1844, 2147483648
    %v1895 = vxor.u32 %v1846, 2147483648
    %v1896 = vxor.u32 %v1885, 2147483648
    %v1897 = vmul.f32 %v1890, 1.442695
    %v1898 = vpow.pop %v1897
    %v1899 = vmul.f32 %v1891, 1.442695
    %v1900 = vpow.pop %v1899
    %v1901 = vmul.f32 %v1892, 1.442695
    %v1902 = vpow.pop %v1901
    %v1903 = vmul.f32 %v1893, 1.442695
    %v1904 = vpow.pop %v1903
    %v1905 = vmul.f32 %v1894, 1.442695
    %v1906 = vpow.pop %v1905
    %v1907 = vmul.f32 %v1895, 1.442695
    %v1908 = vpow.pop %v1907
    %v1909 = vmul.f32 %v1896, 1.442695
    %v1910 = vpow.pop %v1909
    %v1911 = vadd.f32 %v1898, 1.0
    %v1912 = vadd.f32 %v1900, 1.0
    %v1913 = vadd.f32 %v1902, 1.0
    %v1914 = vadd.f32 %v1904, 1.0
    %v1915 = vadd.f32 %v1906, 1.0
    %v1916 = vadd.f32 %v1908, 1.0
    %v1917 = vadd.f32 %v1910, 1.0
    %v1918 = vrcp.pop %v1911
    %v1919 = vmul.f32 1.0, %v1918
    %v1920 = vrcp.pop %v1912
    %v1921 = vmul.f32 1.0, %v1920
    %v1922 = vrcp.pop %v1913
    %v1923 = vmul.f32 1.0, %v1922
    %v1924 = vrcp.pop %v1914
    %v1925 = vmul.f32 1.0, %v1924
    %v1926 = vrcp.pop %v1915
    %v1927 = vmul.f32 1.0, %v1926
    %v1928 = vrcp.pop %v1916
    %v1929 = vmul.f32 1.0, %v1928
    %v1930 = vrcp.pop %v1917
    %v1931 = vmul.f32 1.0, %v1930
    %1932 = vst [vmem:[#allocation2] sm:$0xff] %v1919
    %1933 = vst [vmem:[#allocation2 + $0x8] sm:$0xff] %v1921
    %1934 = vst [vmem:[#allocation2 + $0x10] sm:$0xff] %v1923
    %1935 = vst [vmem:[#allocation2 + $0x18] sm:$0xff] %v1925
    %1936 = vst [vmem:[#allocation2 + $0x20] sm:$0xff] %v1927
    %1937 = vst [vmem:[#allocation2 + $0x28] sm:$0xff] %v1929
    %1938 = vst [vmem:[#allocation2 + $0x30] sm:$0xff] %v1931
    // Predicated region
    $region86: #{ae_forward.1} parent=1 // pred_check
      _
    $region87: #{ae_forward.1} parent=1 // pred_check_branch
      %1940 = sbr.rel (0) target = $region89
    $region88: #{ae_forward.1} parent=1 // pred_region
      %s1942 = ssub.s32 896, 896
      %1943 = vsyncadd [#allocation3], %s1942
      %s1945 = sshll.u32 [#allocation2], 4
      %s1946 = int_to_ptr.vmem [resolvable:$true] %s1945
      %1948 = dma.vmem_to_hbm [thread:$0]  %s1946, 896, %s21, [#allocation3]
    $region89: #{ae_forward.1} parent=1 // pred_fallthru
      _
    // Predicated region
    $region90: #{ae_forward.1} parent=1 // pred_check
      _
    $region91: #{ae_forward.1} parent=1 // pred_check_branch
      %1950 = sbr.rel (0) target = $region93
    $region92: #{ae_forward.1} parent=1 // pred_region
      %1951 = dma.done [#allocation3], 896
    $region93: #{ae_forward.1} parent=1 // pred_fallthru
      _
    %1952 = vsyncpa [#allocation3], 1

</llo_original>
